<compile_context>
chip_gen: v7x
topology: tpu7x:2x2x1
jax: 0.10.0
libtpu: 0.0.40
codegen_flags: <defaults>
</compile_context>

<pallas_src>
import math
import functools

import jax
import jax.numpy as jnp
from jax.experimental import pallas as pl
from jax.experimental.pallas import tpu as pltpu


def llama_layer_kernel(x_ref, wq_ref, wk_ref, wv_ref, wo_ref,
                       wg_ref, wu_ref, wd_ref,
                       ln1_ref, ln2_ref,
                       cos_ref, sin_ref,
                       out_ref, *, eps, num_heads, head_dim):
    f32 = jnp.float32
    cdt = wq_ref.dtype                         # matmul compute dtype (bf16)
    N, H = x_ref.shape
    x = x_ref[...].astype(f32)                 # (N, H)

    # ---- input RMSNorm (stats in f32) ------------------------------------
    var = jnp.mean(x * x, axis=-1, keepdims=True)
    xn = (x * jax.lax.rsqrt(var + eps) * ln1_ref[...]).astype(cdt)

    # ---- q / k / v projections (bf16 in, f32 accumulate on the MXU) ------
    q = jnp.dot(xn, wq_ref[...], preferred_element_type=f32)
    k = jnp.dot(xn, wk_ref[...], preferred_element_type=f32)
    v = jnp.dot(xn, wv_ref[...], preferred_element_type=f32)

    # ---- split heads: (N, H) -> (nh, N, hd) via leading-dim stack ---------
    # (lane-aligned for real head_dim=128; tiny relayout at toy head_dim=8)
    def split_heads(a):
        return jnp.stack(
            [a[:, h * head_dim:(h + 1) * head_dim] for h in range(num_heads)],
            axis=0)

    q3 = split_heads(q)
    k3 = split_heads(k)
    v3 = split_heads(v).astype(cdt)

    # ---- rotary embedding ("rotate_half" form; the wrapper de-interleaved
    # the q/k weight columns so this matches the interleaved-pair reference) -
    half = head_dim // 2
    cos = cos_ref[...][None]                   # (1, N, hd) f32
    sin = sin_ref[...][None]

    def rope(a):                               # a: (nh, N, hd) f32
        rot = jnp.concatenate([-a[..., half:], a[..., :half]], axis=-1)
        return a * cos + rot * sin

    scale = 1.0 / math.sqrt(head_dim)
    q3 = (rope(q3) * scale).astype(cdt)
    k3 = rope(k3).astype(cdt)

    # ---- causal self-attention, all heads in one batched contraction ------
    s = jnp.einsum('hqd,hkd->hqk', q3, k3,
                   preferred_element_type=f32)               # (nh, N, N)
    row = jax.lax.broadcasted_iota(jnp.int32, (N, N), 0)
    col = jax.lax.broadcasted_iota(jnp.int32, (N, N), 1)
    s = jnp.where((col <= row)[None], s, f32(-1e30))         # in-kernel mask
    s = s - jnp.max(s, axis=-1, keepdims=True)
    p = jnp.exp(s)
    p = p * pl.reciprocal(jnp.sum(p, axis=-1, keepdims=True), approx=True)
    o3 = jnp.einsum('hqk,hkd->hqd', p.astype(cdt), v3,
                    preferred_element_type=f32)              # (nh, N, hd)

    # ---- o_proj (head-batched, summed over heads) + residual --------------
    ho = jnp.einsum('hqd,hdk->hqk', o3.astype(cdt), wo_ref[...],
                    preferred_element_type=f32)              # (nh, N, H)
    h1 = x + jnp.sum(ho, axis=0)

    # ---- post-attention RMSNorm -------------------------------------------
    var2 = jnp.mean(h1 * h1, axis=-1, keepdims=True)
    h1n = (h1 * jax.lax.rsqrt(var2 + eps) * ln2_ref[...]).astype(cdt)

    # ---- MLP: down( silu(gate(x)) * up(x) ) + residual ---------------------
    g = jnp.dot(h1n, wg_ref[...], preferred_element_type=f32)
    u = jnp.dot(h1n, wu_ref[...], preferred_element_type=f32)
    act = (g * jax.nn.sigmoid(g) * u).astype(cdt)
    mlp = jnp.dot(act, wd_ref[...], preferred_element_type=f32)

    out_ref[...] = (h1 + mlp).astype(out_ref.dtype)


def llama_layer_pallas(x, params, cos_half, sin_half, *, eps, num_heads, head_dim):
    """params hold f32 weights in x@W layout; cos/sin are (N, head_dim//2)."""
    B, N, H = x.shape
    I = params['wg'].shape[1]
    cdt = jnp.bfloat16

    # De-interleave each head's q/k columns (even dims first, then odd) so the
    # in-kernel RoPE is the cheap rotate_half form.  Attention scores are
    # invariant under this joint q/k permutation, so the layer output is
    # unchanged.  (TODO(synk): an emitted KV cache would carry this permuted
    # per-head layout.)
    perm = jnp.concatenate([jnp.arange(0, head_dim, 2),
                            jnp.arange(1, head_dim, 2)])
    col_perm = (jnp.arange(num_heads)[:, None] * head_dim
                + perm[None, :]).reshape(-1)

    wq = params['wq'][:, col_perm].astype(cdt)
    wk = params['wk'][:, col_perm].astype(cdt)
    wv = params['wv'].astype(cdt)
    wo = params['wo'].reshape(num_heads, head_dim, H).astype(cdt)
    wg = params['wg'].astype(cdt)
    wu = params['wu'].astype(cdt)
    wd = params['wd'].astype(cdt)

    # rotate_half-form rotary tables, (N, head_dim): [c_0..c_{hd/2-1}, c_0..].
    cos_cat = jnp.concatenate([cos_half, cos_half], axis=-1)
    sin_cat = jnp.concatenate([sin_half, sin_half], axis=-1)

    kernel = functools.partial(llama_layer_kernel, eps=eps,
                               num_heads=num_heads, head_dim=head_dim)

    def resident(shape):
        return pl.BlockSpec(shape, lambda b: (0,) * len(shape))

    in_specs = [
        pl.BlockSpec((None, N, H), lambda b: (b, 0, 0)),        # hidden_states
        resident((H, H)), resident((H, H)), resident((H, H)),   # wq wk wv
        resident((num_heads, head_dim, H)),                     # wo (per head)
        resident((H, I)), resident((H, I)), resident((I, H)),   # wg wu wd
        resident((1, H)), resident((1, H)),                     # ln1 ln2
        resident((N, head_dim)), resident((N, head_dim)),       # cos sin
    ]

    return pl.pallas_call(
        kernel,
        out_shape=jax.ShapeDtypeStruct((B, N, H), x.dtype),
        grid_spec=pltpu.PrefetchScalarGridSpec(
            num_scalar_prefetch=0,
            grid=(B,),
            in_specs=in_specs,
            out_specs=pl.BlockSpec((None, N, H), lambda b: (b, 0, 0))),
        compiler_params=pltpu.CompilerParams(
            dimension_semantics=("parallel",),
            vmem_limit_bytes=32 * 1024 * 1024),
    )(x, wq, wk, wv, wo, wg, wu, wd,
      params['ln1'], params['ln2'], cos_cat, sin_cat)


# --------------------------- pure-JAX reference ----------------------------
def llama_layer_ref(x, params, cos_half, sin_half, *, eps, num_heads, head_dim):
    B, N, H = x.shape

    def rms(h, w):
        var = jnp.mean(h.astype(jnp.float32) ** 2, axis=-1, keepdims=True)
        return h * jax.lax.rsqrt(var + eps) * w

    xn = rms(x, params['ln1'][0])
    q = (xn @ params['wq']).reshape(B, N, num_heads, head_dim)
    k = (xn @ params['wk']).reshape(B, N, num_heads, head_dim)
    v = (xn @ params['wv']).reshape(B, N, num_heads, head_dim)

    def rope(a):
        ap = a.reshape(B, N, num_heads, head_dim // 2, 2)
        a0, a1 = ap[..., 0], ap[..., 1]
        c = cos_half[None, :, None, :]
        s = sin_half[None, :, None, :]
        o = jnp.stack([a0 * c - a1 * s, a0 * s + a1 * c], axis=-1)
        return o.reshape(B, N, num_heads, head_dim)

    q, k = rope(q), rope(k)
    q = q.transpose(0, 2, 1, 3)
    k = k.transpose(0, 2, 1, 3)
    v = v.transpose(0, 2, 1, 3)
    s = jnp.einsum('bhqd,bhkd->bhqk', q, k) / math.sqrt(head_dim)
    row = jnp.arange(N)[:, None]
    col = jnp.arange(N)[None, :]
    s = s + jnp.where(col > row, jnp.float32(-1e30), jnp.float32(0.0))
    p = jax.nn.softmax(s, axis=-1)
    o = jnp.einsum('bhqk,bhkd->bhqd', p, v)
    o = o.transpose(0, 2, 1, 3).reshape(B, N, H)
    h1 = x + o @ params['wo']
    h1n = rms(h1, params['ln2'][0])
    g = h1n @ params['wg']
    u = h1n @ params['wu']
    return h1 + (jax.nn.silu(g) * u) @ params['wd']


if __name__ == "__main__":
    # Small config consistent with the module: hidden=32, 4 heads (head_dim=8),
    # intermediate=64, batch=2, seq=8.
    B, N, H = 2, 8, 32
    num_heads = 4
    head_dim = H // num_heads
    I = 64
    eps = 1e-5

    key = jax.random.PRNGKey(0)
    ks = jax.random.split(key, 8)
    sc = 0.05
    params = {
        'wq': sc * jax.random.normal(ks[0], (H, H), jnp.float32),
        'wk': sc * jax.random.normal(ks[1], (H, H), jnp.float32),
        'wv': sc * jax.random.normal(ks[2], (H, H), jnp.float32),
        'wo': sc * jax.random.normal(ks[3], (H, H), jnp.float32),
        'wg': sc * jax.random.normal(ks[4], (H, I), jnp.float32),
        'wu': sc * jax.random.normal(ks[5], (H, I), jnp.float32),
        'wd': sc * jax.random.normal(ks[6], (I, H), jnp.float32),
        'ln1': jnp.ones((1, H), jnp.float32),   # RMSNormalize init = ones
        'ln2': jnp.ones((1, H), jnp.float32),
    }
    x = jax.random.normal(ks[7], (B, N, H), jnp.float32)

    # Rotary tables (start_pos = 0), matching RotaryPositionEmbedding.
    inv_freq = 1.0 / (10000.0 ** (jnp.arange(0, head_dim, 2, dtype=jnp.float32)
                                  / head_dim))
    t = jnp.arange(N, dtype=jnp.float32)
    ang = t[:, None] * inv_freq[None, :]                 # (N, head_dim/2)
    cos_half = jnp.cos(ang)
    sin_half = jnp.sin(ang)

    out = llama_layer_pallas(x, params, cos_half, sin_half,
                             eps=eps, num_heads=num_heads, head_dim=head_dim)
    out = jax.block_until_ready(out)

    ref = llama_layer_ref(x, params, cos_half, sin_half,
                          eps=eps, num_heads=num_heads, head_dim=head_dim)
    assert out.shape == (B, N, H)
    assert jnp.allclose(out, ref, rtol=2e-2, atol=2e-2), (
        f"max abs diff {jnp.max(jnp.abs(out - ref))}")

    print("KERNEL_OK")
</pallas_src>

<mosaic_0001>
module attributes {stable_mosaic.version = 11 : i64} {
  func.func @llama_layer_kernel(%arg0: i32, %arg1: memref<1x8x32xf32, #tpu.memory_space<vmem>>, %arg2: memref<32x32xbf16, #tpu.memory_space<vmem>>, %arg3: memref<32x32xbf16, #tpu.memory_space<vmem>>, %arg4: memref<32x32xbf16, #tpu.memory_space<vmem>>, %arg5: memref<4x8x32xbf16, #tpu.memory_space<vmem>>, %arg6: memref<32x64xbf16, #tpu.memory_space<vmem>>, %arg7: memref<32x64xbf16, #tpu.memory_space<vmem>>, %arg8: memref<64x32xbf16, #tpu.memory_space<vmem>>, %arg9: memref<1x32xf32, #tpu.memory_space<vmem>>, %arg10: memref<1x32xf32, #tpu.memory_space<vmem>>, %arg11: memref<8x8xf32, #tpu.memory_space<vmem>>, %arg12: memref<8x8xf32, #tpu.memory_space<vmem>>, %arg13: memref<1x8x32xf32, #tpu.memory_space<vmem>>) attributes {dimension_semantics = [#tpu.dimension_semantics<parallel>], iteration_bounds = array<i64: 2>, scalar_prefetch = 0 : i64, scratch_operands = 0 : i64, tpu.core_type = #tpu.core_type<tc>, window_params = [{transform_indices = @transform_0, window_bounds = array<i64: 1, 8, 32>}, {pipeline_mode = #tpu.pipeline_mode<synchronous>, transform_indices = @transform_1, window_bounds = array<i64: 32, 32>}, {pipeline_mode = #tpu.pipeline_mode<synchronous>, transform_indices = @transform_2, window_bounds = array<i64: 32, 32>}, {pipeline_mode = #tpu.pipeline_mode<synchronous>, transform_indices = @transform_3, window_bounds = array<i64: 32, 32>}, {pipeline_mode = #tpu.pipeline_mode<synchronous>, transform_indices = @transform_4, window_bounds = array<i64: 4, 8, 32>}, {pipeline_mode = #tpu.pipeline_mode<synchronous>, transform_indices = @transform_5, window_bounds = array<i64: 32, 64>}, {pipeline_mode = #tpu.pipeline_mode<synchronous>, transform_indices = @transform_6, window_bounds = array<i64: 32, 64>}, {pipeline_mode = #tpu.pipeline_mode<synchronous>, transform_indices = @transform_7, window_bounds = array<i64: 64, 32>}, {pipeline_mode = #tpu.pipeline_mode<synchronous>, transform_indices = @transform_8, window_bounds = array<i64: 1, 32>}, {pipeline_mode = #tpu.pipeline_mode<synchronous>, transform_indices = @transform_9, window_bounds = array<i64: 1, 32>}, {pipeline_mode = #tpu.pipeline_mode<synchronous>, transform_indices = @transform_10, window_bounds = array<i64: 8, 8>}, {pipeline_mode = #tpu.pipeline_mode<synchronous>, transform_indices = @transform_11, window_bounds = array<i64: 8, 8>}, {transform_indices = @transform_12, window_bounds = array<i64: 1, 8, 32>}]} {
    %c0 = arith.constant 0 : index
    %c0_0 = arith.constant 0 : index
    %c0_1 = arith.constant 0 : index
    %0 = vector.load %arg1[%c0, %c0_0, %c0_1] : memref<1x8x32xf32, #tpu.memory_space<vmem>>, vector<1x8x32xf32>
    %1 = vector.shape_cast %0 : vector<1x8x32xf32> to vector<8x32xf32>
    %2 = arith.mulf %1, %1 : vector<8x32xf32>
    %cst = arith.constant dense<0.000000e+00> : vector<8xf32>
    %3 = vector.multi_reduction <add>, %2, %cst [1] : vector<8x32xf32> to vector<8xf32>
    %4 = vector.shape_cast %3 : vector<8xf32> to vector<8x1xf32>
    %cst_2 = arith.constant 3.200000e+01 : f32
    %5 = vector.broadcast %cst_2 : f32 to vector<8x1xf32>
    %6 = arith.divf %4, %5 : vector<8x1xf32>
    %cst_3 = arith.constant 9.99999974E-6 : f32
    %7 = vector.broadcast %cst_3 : f32 to vector<8x1xf32>
    %8 = arith.addf %6, %7 : vector<8x1xf32>
    %9 = math.rsqrt %8 : vector<8x1xf32>
    %10 = vector.broadcast %9 : vector<8x1xf32> to vector<8x32xf32>
    %11 = arith.mulf %1, %10 : vector<8x32xf32>
    %c0_4 = arith.constant 0 : index
    %c0_5 = arith.constant 0 : index
    %12 = vector.load %arg9[%c0_4, %c0_5] : memref<1x32xf32, #tpu.memory_space<vmem>>, vector<1x32xf32>
    %13 = vector.broadcast %12 : vector<1x32xf32> to vector<8x32xf32>
    %14 = arith.mulf %11, %13 : vector<8x32xf32>
    %15 = arith.truncf %14 : vector<8x32xf32> to vector<8x32xbf16>
    %c0_6 = arith.constant 0 : index
    %c0_7 = arith.constant 0 : index
    %16 = vector.load %arg2[%c0_6, %c0_7] : memref<32x32xbf16, #tpu.memory_space<vmem>>, vector<32x32xbf16>
    %cst_8 = arith.constant dense<0.000000e+00> : vector<8x32xf32>
    %17 = tpu.matmul %15, %16, %cst_8 {dimension_numbers = #tpu.dot_dimension_numbers<[1], [0], [0], [1], [0, 0, 1, 1], [], []>} : vector<8x32xbf16>, vector<32x32xbf16>, vector<8x32xf32> -> vector<8x32xf32>
    %c0_9 = arith.constant 0 : index
    %c0_10 = arith.constant 0 : index
    %18 = vector.load %arg3[%c0_9, %c0_10] : memref<32x32xbf16, #tpu.memory_space<vmem>>, vector<32x32xbf16>
    %cst_11 = arith.constant dense<0.000000e+00> : vector<8x32xf32>
    %19 = tpu.matmul %15, %18, %cst_11 {dimension_numbers = #tpu.dot_dimension_numbers<[1], [0], [0], [1], [0, 0, 1, 1], [], []>} : vector<8x32xbf16>, vector<32x32xbf16>, vector<8x32xf32> -> vector<8x32xf32>
    %c0_12 = arith.constant 0 : index
    %c0_13 = arith.constant 0 : index
    %20 = vector.load %arg4[%c0_12, %c0_13] : memref<32x32xbf16, #tpu.memory_space<vmem>>, vector<32x32xbf16>
    %cst_14 = arith.constant dense<0.000000e+00> : vector<8x32xf32>
    %21 = tpu.matmul %15, %20, %cst_14 {dimension_numbers = #tpu.dot_dimension_numbers<[1], [0], [0], [1], [0, 0, 1, 1], [], []>} : vector<8x32xbf16>, vector<32x32xbf16>, vector<8x32xf32> -> vector<8x32xf32>
    %22 = vector.extract_strided_slice %17 {offsets = [0, 0], sizes = [8, 8], strides = [1, 1]} : vector<8x32xf32> to vector<8x8xf32>
    %23 = vector.extract_strided_slice %17 {offsets = [0, 8], sizes = [8, 8], strides = [1, 1]} : vector<8x32xf32> to vector<8x8xf32>
    %24 = vector.extract_strided_slice %17 {offsets = [0, 16], sizes = [8, 8], strides = [1, 1]} : vector<8x32xf32> to vector<8x8xf32>
    %25 = vector.extract_strided_slice %17 {offsets = [0, 24], sizes = [8, 8], strides = [1, 1]} : vector<8x32xf32> to vector<8x8xf32>
    %26 = vector.shape_cast %22 : vector<8x8xf32> to vector<1x8x8xf32>
    %27 = vector.shape_cast %23 : vector<8x8xf32> to vector<1x8x8xf32>
    %28 = vector.shape_cast %24 : vector<8x8xf32> to vector<1x8x8xf32>
    %29 = vector.shape_cast %25 : vector<8x8xf32> to vector<1x8x8xf32>
    %30 = tpu.concatenate %26, %27, %28, %29 in 0 : vector<1x8x8xf32>, vector<1x8x8xf32>, vector<1x8x8xf32>, vector<1x8x8xf32> -> vector<4x8x8xf32>
    %31 = vector.extract_strided_slice %19 {offsets = [0, 0], sizes = [8, 8], strides = [1, 1]} : vector<8x32xf32> to vector<8x8xf32>
    %32 = vector.extract_strided_slice %19 {offsets = [0, 8], sizes = [8, 8], strides = [1, 1]} : vector<8x32xf32> to vector<8x8xf32>
    %33 = vector.extract_strided_slice %19 {offsets = [0, 16], sizes = [8, 8], strides = [1, 1]} : vector<8x32xf32> to vector<8x8xf32>
    %34 = vector.extract_strided_slice %19 {offsets = [0, 24], sizes = [8, 8], strides = [1, 1]} : vector<8x32xf32> to vector<8x8xf32>
    %35 = vector.shape_cast %31 : vector<8x8xf32> to vector<1x8x8xf32>
    %36 = vector.shape_cast %32 : vector<8x8xf32> to vector<1x8x8xf32>
    %37 = vector.shape_cast %33 : vector<8x8xf32> to vector<1x8x8xf32>
    %38 = vector.shape_cast %34 : vector<8x8xf32> to vector<1x8x8xf32>
    %39 = tpu.concatenate %35, %36, %37, %38 in 0 : vector<1x8x8xf32>, vector<1x8x8xf32>, vector<1x8x8xf32>, vector<1x8x8xf32> -> vector<4x8x8xf32>
    %40 = vector.extract_strided_slice %21 {offsets = [0, 0], sizes = [8, 8], strides = [1, 1]} : vector<8x32xf32> to vector<8x8xf32>
    %41 = vector.extract_strided_slice %21 {offsets = [0, 8], sizes = [8, 8], strides = [1, 1]} : vector<8x32xf32> to vector<8x8xf32>
    %42 = vector.extract_strided_slice %21 {offsets = [0, 16], sizes = [8, 8], strides = [1, 1]} : vector<8x32xf32> to vector<8x8xf32>
    %43 = vector.extract_strided_slice %21 {offsets = [0, 24], sizes = [8, 8], strides = [1, 1]} : vector<8x32xf32> to vector<8x8xf32>
    %44 = vector.shape_cast %40 : vector<8x8xf32> to vector<1x8x8xf32>
    %45 = vector.shape_cast %41 : vector<8x8xf32> to vector<1x8x8xf32>
    %46 = vector.shape_cast %42 : vector<8x8xf32> to vector<1x8x8xf32>
    %47 = vector.shape_cast %43 : vector<8x8xf32> to vector<1x8x8xf32>
    %48 = tpu.concatenate %44, %45, %46, %47 in 0 : vector<1x8x8xf32>, vector<1x8x8xf32>, vector<1x8x8xf32>, vector<1x8x8xf32> -> vector<4x8x8xf32>
    %49 = arith.truncf %48 : vector<4x8x8xf32> to vector<4x8x8xbf16>
    %c0_15 = arith.constant 0 : index
    %c0_16 = arith.constant 0 : index
    %50 = vector.load %arg11[%c0_15, %c0_16] : memref<8x8xf32, #tpu.memory_space<vmem>>, vector<8x8xf32>
    %51 = vector.shape_cast %50 : vector<8x8xf32> to vector<1x8x8xf32>
    %c0_17 = arith.constant 0 : index
    %c0_18 = arith.constant 0 : index
    %52 = vector.load %arg12[%c0_17, %c0_18] : memref<8x8xf32, #tpu.memory_space<vmem>>, vector<8x8xf32>
    %53 = vector.shape_cast %52 : vector<8x8xf32> to vector<1x8x8xf32>
    %54 = vector.extract_strided_slice %30 {offsets = [0, 0, 4], sizes = [4, 8, 4], strides = [1, 1, 1]} : vector<4x8x8xf32> to vector<4x8x4xf32>
    %cst_19 = arith.constant 0.000000e+00 : f32
    %55 = vector.broadcast %cst_19 : f32 to vector<4x8x4xf32>
    %56 = arith.subf %55, %54 : vector<4x8x4xf32>
    %57 = vector.extract_strided_slice %30 {offsets = [0, 0, 0], sizes = [4, 8, 4], strides = [1, 1, 1]} : vector<4x8x8xf32> to vector<4x8x4xf32>
    %58 = tpu.concatenate %56, %57 in 2 : vector<4x8x4xf32>, vector<4x8x4xf32> -> vector<4x8x8xf32>
    %59 = vector.broadcast %51 : vector<1x8x8xf32> to vector<4x8x8xf32>
    %60 = arith.mulf %30, %59 : vector<4x8x8xf32>
    %61 = vector.broadcast %53 : vector<1x8x8xf32> to vector<4x8x8xf32>
    %62 = arith.mulf %58, %61 : vector<4x8x8xf32>
    %63 = arith.addf %60, %62 : vector<4x8x8xf32>
    %cst_20 = arith.constant 0.353553385 : f32
    %64 = vector.broadcast %cst_20 : f32 to vector<4x8x8xf32>
    %65 = arith.mulf %63, %64 : vector<4x8x8xf32>
    %66 = arith.truncf %65 : vector<4x8x8xf32> to vector<4x8x8xbf16>
    %67 = vector.extract_strided_slice %39 {offsets = [0, 0, 4], sizes = [4, 8, 4], strides = [1, 1, 1]} : vector<4x8x8xf32> to vector<4x8x4xf32>
    %cst_21 = arith.constant 0.000000e+00 : f32
    %68 = vector.broadcast %cst_21 : f32 to vector<4x8x4xf32>
    %69 = arith.subf %68, %67 : vector<4x8x4xf32>
    %70 = vector.extract_strided_slice %39 {offsets = [0, 0, 0], sizes = [4, 8, 4], strides = [1, 1, 1]} : vector<4x8x8xf32> to vector<4x8x4xf32>
    %71 = tpu.concatenate %69, %70 in 2 : vector<4x8x4xf32>, vector<4x8x4xf32> -> vector<4x8x8xf32>
    %72 = vector.broadcast %51 : vector<1x8x8xf32> to vector<4x8x8xf32>
    %73 = arith.mulf %39, %72 : vector<4x8x8xf32>
    %74 = vector.broadcast %53 : vector<1x8x8xf32> to vector<4x8x8xf32>
    %75 = arith.mulf %71, %74 : vector<4x8x8xf32>
    %76 = arith.addf %73, %75 : vector<4x8x8xf32>
    %77 = arith.truncf %76 : vector<4x8x8xf32> to vector<4x8x8xbf16>
    "tpu.trace_start"() <{level = 10 : i32, message = "hqd,hkd->hqk"}> : () -> ()
    %cst_22 = arith.constant dense<0.000000e+00> : vector<4x8x8xf32>
    %78 = tpu.matmul %66, %77, %cst_22 {dimension_numbers = #tpu.dot_dimension_numbers<[2], [2], [1], [1], [0, 0, 0, 1, 1, 1], [0], [0]>} : vector<4x8x8xbf16>, vector<4x8x8xbf16>, vector<4x8x8xf32> -> vector<4x8x8xf32>
    "tpu.trace_stop"() : () -> ()
    %79 = tpu.iota {dimensions = array<i32: 0>} : vector<8x8xi32>
    %80 = tpu.iota {dimensions = array<i32: 1>} : vector<8x8xi32>
    %81 = arith.cmpi sle, %80, %79 : vector<8x8xi32>
    %82 = vector.shape_cast %81 : vector<8x8xi1> to vector<1x8x8xi1>
    %cst_23 = arith.constant -1.000000e+30 : f32
    %83 = vector.shape_cast %82 : vector<1x8x8xi1> to vector<1x8x8xi1>
    %84 = vector.broadcast %83 : vector<1x8x8xi1> to vector<4x8x8xi1>
    %85 = vector.broadcast %cst_23 : f32 to vector<4x8x8xf32>
    %86 = arith.select %84, %78, %85 : vector<4x8x8xi1>, vector<4x8x8xf32>
    %cst_24 = arith.constant dense<0xFF800000> : vector<4x8xf32>
    %87 = vector.multi_reduction <maximumf>, %86, %cst_24 [2] : vector<4x8x8xf32> to vector<4x8xf32>
    %88 = vector.shape_cast %87 : vector<4x8xf32> to vector<4x8x1xf32>
    %89 = vector.broadcast %88 : vector<4x8x1xf32> to vector<4x8x8xf32>
    %90 = arith.subf %86, %89 : vector<4x8x8xf32>
    %91 = math.exp %90 : vector<4x8x8xf32>
    %cst_25 = arith.constant dense<0.000000e+00> : vector<4x8xf32>
    %92 = vector.multi_reduction <add>, %91, %cst_25 [2] : vector<4x8x8xf32> to vector<4x8xf32>
    %93 = vector.shape_cast %92 : vector<4x8xf32> to vector<4x8x1xf32>
    %94 = tpu.reciprocal %93 {approx = true} : vector<4x8x1xf32> -> vector<4x8x1xf32>
    %95 = vector.broadcast %94 : vector<4x8x1xf32> to vector<4x8x8xf32>
    %96 = arith.mulf %91, %95 : vector<4x8x8xf32>
    %97 = arith.truncf %96 : vector<4x8x8xf32> to vector<4x8x8xbf16>
    "tpu.trace_start"() <{level = 10 : i32, message = "hqk,hkd->hqd"}> : () -> ()
    %cst_26 = arith.constant dense<0.000000e+00> : vector<4x8x8xf32>
    %98 = tpu.matmul %97, %49, %cst_26 {dimension_numbers = #tpu.dot_dimension_numbers<[2], [1], [1], [2], [0, 0, 0, 1, 1, 2], [0], [0]>} : vector<4x8x8xbf16>, vector<4x8x8xbf16>, vector<4x8x8xf32> -> vector<4x8x8xf32>
    "tpu.trace_stop"() : () -> ()
    %99 = arith.truncf %98 : vector<4x8x8xf32> to vector<4x8x8xbf16>
    %c0_27 = arith.constant 0 : index
    %c0_28 = arith.constant 0 : index
    %c0_29 = arith.constant 0 : index
    %100 = vector.load %arg5[%c0_27, %c0_28, %c0_29] : memref<4x8x32xbf16, #tpu.memory_space<vmem>>, vector<4x8x32xbf16>
    "tpu.trace_start"() <{level = 10 : i32, message = "hqd,hdk->hqk"}> : () -> ()
    %cst_30 = arith.constant dense<0.000000e+00> : vector<4x8x32xf32>
    %101 = tpu.matmul %99, %100, %cst_30 {dimension_numbers = #tpu.dot_dimension_numbers<[2], [1], [1], [2], [0, 0, 0, 1, 1, 2], [0], [0]>} : vector<4x8x8xbf16>, vector<4x8x32xbf16>, vector<4x8x32xf32> -> vector<4x8x32xf32>
    "tpu.trace_stop"() : () -> ()
    %cst_31 = arith.constant dense<0.000000e+00> : vector<8x32xf32>
    %102 = vector.multi_reduction <add>, %101, %cst_31 [0] : vector<4x8x32xf32> to vector<8x32xf32>
    %103 = arith.addf %1, %102 : vector<8x32xf32>
    %104 = arith.mulf %103, %103 : vector<8x32xf32>
    %cst_32 = arith.constant dense<0.000000e+00> : vector<8xf32>
    %105 = vector.multi_reduction <add>, %104, %cst_32 [1] : vector<8x32xf32> to vector<8xf32>
    %106 = vector.shape_cast %105 : vector<8xf32> to vector<8x1xf32>
    %cst_33 = arith.constant 3.200000e+01 : f32
    %107 = vector.broadcast %cst_33 : f32 to vector<8x1xf32>
    %108 = arith.divf %106, %107 : vector<8x1xf32>
    %cst_34 = arith.constant 9.99999974E-6 : f32
    %109 = vector.broadcast %cst_34 : f32 to vector<8x1xf32>
    %110 = arith.addf %108, %109 : vector<8x1xf32>
    %111 = math.rsqrt %110 : vector<8x1xf32>
    %112 = vector.broadcast %111 : vector<8x1xf32> to vector<8x32xf32>
    %113 = arith.mulf %103, %112 : vector<8x32xf32>
    %c0_35 = arith.constant 0 : index
    %c0_36 = arith.constant 0 : index
    %114 = vector.load %arg10[%c0_35, %c0_36] : memref<1x32xf32, #tpu.memory_space<vmem>>, vector<1x32xf32>
    %115 = vector.broadcast %114 : vector<1x32xf32> to vector<8x32xf32>
    %116 = arith.mulf %113, %115 : vector<8x32xf32>
    %117 = arith.truncf %116 : vector<8x32xf32> to vector<8x32xbf16>
    %c0_37 = arith.constant 0 : index
    %c0_38 = arith.constant 0 : index
    %118 = vector.load %arg6[%c0_37, %c0_38] : memref<32x64xbf16, #tpu.memory_space<vmem>>, vector<32x64xbf16>
    %cst_39 = arith.constant dense<0.000000e+00> : vector<8x64xf32>
    %119 = tpu.matmul %117, %118, %cst_39 {dimension_numbers = #tpu.dot_dimension_numbers<[1], [0], [0], [1], [0, 0, 1, 1], [], []>} : vector<8x32xbf16>, vector<32x64xbf16>, vector<8x64xf32> -> vector<8x64xf32>
    %c0_40 = arith.constant 0 : index
    %c0_41 = arith.constant 0 : index
    %120 = vector.load %arg7[%c0_40, %c0_41] : memref<32x64xbf16, #tpu.memory_space<vmem>>, vector<32x64xbf16>
    %cst_42 = arith.constant dense<0.000000e+00> : vector<8x64xf32>
    %121 = tpu.matmul %117, %120, %cst_42 {dimension_numbers = #tpu.dot_dimension_numbers<[1], [0], [0], [1], [0, 0, 1, 1], [], []>} : vector<8x32xbf16>, vector<32x64xbf16>, vector<8x64xf32> -> vector<8x64xf32>
    %122 = arith.negf %119 : vector<8x64xf32>
    %123 = math.exp %122 : vector<8x64xf32>
    %cst_43 = arith.constant 1.000000e+00 : f32
    %124 = vector.broadcast %cst_43 : f32 to vector<8x64xf32>
    %125 = arith.addf %124, %123 : vector<8x64xf32>
    %126 = arith.divf %124, %125 : vector<8x64xf32>
    %127 = arith.mulf %119, %126 : vector<8x64xf32>
    %128 = arith.mulf %127, %121 : vector<8x64xf32>
    %129 = arith.truncf %128 : vector<8x64xf32> to vector<8x64xbf16>
    %c0_44 = arith.constant 0 : index
    %c0_45 = arith.constant 0 : index
    %130 = vector.load %arg8[%c0_44, %c0_45] : memref<64x32xbf16, #tpu.memory_space<vmem>>, vector<64x32xbf16>
    %cst_46 = arith.constant dense<0.000000e+00> : vector<8x32xf32>
    %131 = tpu.matmul %129, %130, %cst_46 {dimension_numbers = #tpu.dot_dimension_numbers<[1], [0], [0], [1], [0, 0, 1, 1], [], []>} : vector<8x64xbf16>, vector<64x32xbf16>, vector<8x32xf32> -> vector<8x32xf32>
    %132 = arith.addf %103, %131 : vector<8x32xf32>
    %c0_47 = arith.constant 0 : index
    %c0_48 = arith.constant 0 : index
    %c0_49 = arith.constant 0 : index
    %133 = vector.load %arg13[%c0_47, %c0_48, %c0_49] : memref<1x8x32xf32, #tpu.memory_space<vmem>>, vector<1x8x32xf32>
    %134 = vector.shape_cast %133 : vector<1x8x32xf32> to vector<8x32xf32>
    %135 = vector.shape_cast %132 : vector<8x32xf32> to vector<1x8x32xf32>
    tpu.vector_store %arg13[%c0_47, %c0_48, %c0_49], %135 {strides = array<i32>} : memref<1x8x32xf32, #tpu.memory_space<vmem>>, vector<1x8x32xf32>,
    return
  }
  func.func @transform_0(%arg0: i32) -> (i32, i32, i32) {
    %c0_i32 = arith.constant 0 : i32
    %c0_i32_0 = arith.constant 0 : i32
    %c0_i32_1 = arith.constant 0 : i32
    return %arg0, %c0_i32, %c0_i32_0 : i32, i32, i32
  }
  func.func @transform_1(%arg0: i32) -> (i32, i32) {
    %c0_i32 = arith.constant 0 : i32
    %c0_i32_0 = arith.constant 0 : i32
    %c0_i32_1 = arith.constant 0 : i32
    return %c0_i32, %c0_i32_0 : i32, i32
  }
  func.func @transform_2(%arg0: i32) -> (i32, i32) {
    %c0_i32 = arith.constant 0 : i32
    %c0_i32_0 = arith.constant 0 : i32
    %c0_i32_1 = arith.constant 0 : i32
    return %c0_i32, %c0_i32_0 : i32, i32
  }
  func.func @transform_3(%arg0: i32) -> (i32, i32) {
    %c0_i32 = arith.constant 0 : i32
    %c0_i32_0 = arith.constant 0 : i32
    %c0_i32_1 = arith.constant 0 : i32
    return %c0_i32, %c0_i32_0 : i32, i32
  }
  func.func @transform_4(%arg0: i32) -> (i32, i32, i32) {
    %c0_i32 = arith.constant 0 : i32
    %c0_i32_0 = arith.constant 0 : i32
    %c0_i32_1 = arith.constant 0 : i32
    %c0_i32_2 = arith.constant 0 : i32
    return %c0_i32, %c0_i32_0, %c0_i32_1 : i32, i32, i32
  }
  func.func @transform_5(%arg0: i32) -> (i32, i32) {
    %c0_i32 = arith.constant 0 : i32
    %c0_i32_0 = arith.constant 0 : i32
    %c0_i32_1 = arith.constant 0 : i32
    return %c0_i32, %c0_i32_0 : i32, i32
  }
  func.func @transform_6(%arg0: i32) -> (i32, i32) {
    %c0_i32 = arith.constant 0 : i32
    %c0_i32_0 = arith.constant 0 : i32
    %c0_i32_1 = arith.constant 0 : i32
    return %c0_i32, %c0_i32_0 : i32, i32
  }
  func.func @transform_7(%arg0: i32) -> (i32, i32) {
    %c0_i32 = arith.constant 0 : i32
    %c0_i32_0 = arith.constant 0 : i32
    %c0_i32_1 = arith.constant 0 : i32
    return %c0_i32, %c0_i32_0 : i32, i32
  }
  func.func @transform_8(%arg0: i32) -> (i32, i32) {
    %c0_i32 = arith.constant 0 : i32
    %c0_i32_0 = arith.constant 0 : i32
    %c0_i32_1 = arith.constant 0 : i32
    return %c0_i32, %c0_i32_0 : i32, i32
  }
  func.func @transform_9(%arg0: i32) -> (i32, i32) {
    %c0_i32 = arith.constant 0 : i32
    %c0_i32_0 = arith.constant 0 : i32
    %c0_i32_1 = arith.constant 0 : i32
    return %c0_i32, %c0_i32_0 : i32, i32
  }
  func.func @transform_10(%arg0: i32) -> (i32, i32) {
    %c0_i32 = arith.constant 0 : i32
    %c0_i32_0 = arith.constant 0 : i32
    %c0_i32_1 = arith.constant 0 : i32
    return %c0_i32, %c0_i32_0 : i32, i32
  }
  func.func @transform_11(%arg0: i32) -> (i32, i32) {
    %c0_i32 = arith.constant 0 : i32
    %c0_i32_0 = arith.constant 0 : i32
    %c0_i32_1 = arith.constant 0 : i32
    return %c0_i32, %c0_i32_0 : i32, i32
  }
  func.func @transform_12(%arg0: i32) -> (i32, i32, i32) {
    %c0_i32 = arith.constant 0 : i32
    %c0_i32_0 = arith.constant 0 : i32
    %c0_i32_1 = arith.constant 0 : i32
    return %arg0, %c0_i32, %c0_i32_0 : i32, i32, i32
  }
}

</mosaic_0001>

<llo_original>
// kernel: tpu_custom_call.1
$region0: #{tpu_custom_call.1}
  #allocation0 [shape = 'u32[]', space=smem, size = 0x4, offset = 0x4, fixed_abs, tag = 'smem constant byte address 0x4 - core index']
  #allocation1 [shape = 'u32[144,128]{1,0:T(1,128)}', space=vmem, size = 0x12000, scoped, tag = 'internal scratch']
  %s0 = inlined_call_operand.vmem [shape: f32[2,8,32], index: 0, kind: input, shape index: {}]
  %s1 = inlined_call_operand.vmem [shape: bf16[32,32], index: 1, kind: input, shape index: {}]
  %s2 = inlined_call_operand.vmem [shape: bf16[32,32], index: 2, kind: input, shape index: {}]
  %s3 = inlined_call_operand.hbm [shape: bf16[32,32], index: 3, kind: input, shape index: {}]
  %s4 = inlined_call_operand.hbm [shape: bf16[4,8,32], index: 4, kind: input, shape index: {}]
  %s5 = inlined_call_operand.hbm [shape: bf16[32,64], index: 5, kind: input, shape index: {}]
  %s6 = inlined_call_operand.hbm [shape: bf16[32,64], index: 6, kind: input, shape index: {}]
  %s7 = inlined_call_operand.vmem [shape: bf16[64,32], index: 7, kind: input, shape index: {}]
  %s8 = inlined_call_operand.vmem [shape: f32[1,32], index: 8, kind: input, shape index: {}]
  %s9 = inlined_call_operand.vmem [shape: f32[1,32], index: 9, kind: input, shape index: {}]
  %s10 = inlined_call_operand.vmem [shape: f32[8,8], index: 10, kind: input, shape index: {}]
  %s11 = inlined_call_operand.vmem [shape: f32[8,8], index: 11, kind: input, shape index: {}]
  %s12 = inlined_call_operand.hbm [shape: f32[2,8,32], index: 12, kind: output, shape index: {}]
  %s13 = sld [smem:[#allocation0]]
  $region97: #{tpu_custom_call.1} parent=0
    _
  %s15 = ssub.s32 1, %s13
  %s16 = scalar_select 0, %s15, %s13
  $region1: #{tpu_custom_call.1} parent=0
    #allocation2 [shape = 'u8[8192]{0}', space=vmem, size = 0x2000, scoped, tag = 'input window, operand 3, single buffered']
    #allocation3 [shape = 's32[2]{0}', space=sflag, size = 0x8, scoped, tag = 'scoped memory for tpu_custom_call.1']
    #allocation4 [shape = 's32[2]{0}', space=sflag, size = 0x8, scoped, tag = 'scoped memory for tpu_custom_call.1']
    #allocation5 [shape = 'u8[8192]{0}', space=vmem, size = 0x2000, scoped, tag = 'input window, operand 4, single buffered']
    #allocation6 [shape = 's32[1]{0}', space=sflag, size = 0x4, scoped, tag = 'scoped memory for tpu_custom_call.1']
    #allocation7 [shape = 'u8[8192]{0}', space=vmem, size = 0x2000, scoped, tag = 'input window, operand 5, single buffered']
    #allocation8 [shape = 'u8[8192]{0}', space=vmem, size = 0x2000, scoped, tag = 'input window, operand 6, single buffered']
    #allocation9 [shape = 's32[1]{0}', space=sflag, size = 0x4, scoped, tag = 'scoped memory for tpu_custom_call.1']
    #allocation10 [shape = 'u8[8192]{0}', space=vmem, size = 0x2000, scoped, tag = 'output window, operand 0']
    %17 = vsyncpa [#allocation3], 0
    %18 = vsyncpa [#allocation6], 0
    %19 = vsyncpa [#allocation9], 0
    %20 = vsyncpa [#allocation4], 0
    %s21 = scalar_lea.sflag [#allocation4], 1
    %22 = vsyncpa %s21, 0
    loop: start=0, step=1, limit=4
    $region2: #{tpu_custom_call.1} parent=1 // loop_pre_header
      _
    $region3: #{tpu_custom_call.1} parent=1 // loop_header
      %s24 = sphi 0, %s28
      %p25 = scmp.ge.s32.totalorder %s24, 4
      %s34 = sphi 0, %s36
      %s37 = sphi 0, %s34
      %s38 = sphi 0, %s37
      %s54 = sphi 0, %s38
      %s58 = sphi 0, %s58
      %s60 = sphi 0, %s58
      %s61 = sphi 0, %s60
      %s75 = sphi 0, %s61
      %s79 = sphi 0, %s79
      %s81 = sphi 0, %s79
      %s82 = sphi 0, %s81
      %s96 = sphi 0, %s82
      %s100 = sphi 0, %s100
      %s102 = sphi 0, %s100
      %s103 = sphi 0, %s102
      %s117 = sphi 0, %s103
      %s121 = sphi 0, %s121
      %s123 = sphi 0, %s121
      %s124 = sphi 0, %s123
      %s138 = sphi 0, %s124
      %s142 = sphi 0, %s142
      %s144 = sphi 0, %s142
      %s145 = sphi 0, %s144
      %s159 = sphi 0, %s145
      %s163 = sphi 0, %s163
      %s165 = sphi 0, %s163
      %s166 = sphi 0, %s165
      %s180 = sphi 0, %s166
      %s184 = sphi 0, %s184
      %s186 = sphi 0, %s184
      %s187 = sphi 0, %s186
      %s201 = sphi 0, %s187
      %s205 = sphi 0, %s205
      %s207 = sphi 0, %s205
      %s208 = sphi 0, %s207
      %s222 = sphi 0, %s208
      %s226 = sphi 0, %s226
      %s228 = sphi 0, %s226
      %s229 = sphi 0, %s228
      %s243 = sphi 0, %s229
      %s247 = sphi 0, %s247
      %s249 = sphi 0, %s247
      %s250 = sphi 0, %s249
      %s264 = sphi 0, %s250
      %s268 = sphi 0, %s268
      %s270 = sphi 0, %s268
      %s271 = sphi 0, %s270
      %s285 = sphi 0, %s271
      %s291 = sphi 0, %s293
      %s294 = sphi 0, %s291
      %s295 = sphi 0, %s294
      %s311 = sphi 0, %s295
    $region4: #{tpu_custom_call.1} parent=1 // loop_header_branch
      %27 = sbr.rel (%p25) target = $region8
    $region5: #{tpu_custom_call.1} parent=1 // loop_body
      %s29 = ssub.s32 %s24, 1
      %s30 = ssub.s32 %s24, 2
      %s31 = sadd.s32 %s24, 1
      %s32 = ssub.s32 %s24, %s31
      %p33 = scmp.eq.s32.totalorder %s32, 0
      %s35 = sadd.s32 %s34, 1
      %s36 = scalar_select %p33, %s34, %s35
      %p39 = pneg %p33
      %p40 = scmp.eq.s32.totalorder %s24, 1
      %p41 = por %p39, %p40
      %p42 = scmp.ne.s32.totalorder %s34, %s37
      %p43 = scmp.eq.s32.totalorder %s24, 0
      %p44 = por %p42, %p43
      %p45 = scmp.ne.s32.totalorder %s34, %s37
      %p46 = scmp.eq.s32.totalorder %s29, 1
      %p47 = por %p45, %p46
      %p48 = scmp.ne.s32.totalorder %s37, %s38
      %p49 = scmp.eq.s32.totalorder %s29, 0
      %p50 = por %p48, %p49
      %p51 = scmp.ne.s32.totalorder %s37, %s38
      %p52 = scmp.eq.s32.totalorder %s30, 1
      %p53 = por %p51, %p52
      %p55 = scmp.ne.s32.totalorder %s38, %s54
      %p56 = scmp.eq.s32.totalorder %s30, 0
      %p57 = por %p55, %p56
      %s59 = sadd.s32 %s58, 1
      %p62 = scmp.eq.s32.totalorder %s24, 1
      %p63 = scmp.ne.s32.totalorder %s58, %s60
      %p64 = scmp.eq.s32.totalorder %s24, 0
      %p65 = por %p63, %p64
      %p66 = scmp.ne.s32.totalorder %s58, %s60
      %p67 = scmp.eq.s32.totalorder %s29, 1
      %p68 = por %p66, %p67
      %p69 = scmp.ne.s32.totalorder %s60, %s61
      %p70 = scmp.eq.s32.totalorder %s29, 0
      %p71 = por %p69, %p70
      %p72 = scmp.ne.s32.totalorder %s60, %s61
      %p73 = scmp.eq.s32.totalorder %s30, 1
      %p74 = por %p72, %p73
      %p76 = scmp.ne.s32.totalorder %s61, %s75
      %p77 = scmp.eq.s32.totalorder %s30, 0
      %p78 = por %p76, %p77
      %s80 = sadd.s32 %s79, 1
      %p83 = scmp.eq.s32.totalorder %s24, 1
      %p84 = scmp.ne.s32.totalorder %s79, %s81
      %p85 = scmp.eq.s32.totalorder %s24, 0
      %p86 = por %p84, %p85
      %p87 = scmp.ne.s32.totalorder %s79, %s81
      %p88 = scmp.eq.s32.totalorder %s29, 1
      %p89 = por %p87, %p88
      %p90 = scmp.ne.s32.totalorder %s81, %s82
      %p91 = scmp.eq.s32.totalorder %s29, 0
      %p92 = por %p90, %p91
      %p93 = scmp.ne.s32.totalorder %s81, %s82
      %p94 = scmp.eq.s32.totalorder %s30, 1
      %p95 = por %p93, %p94
      %p97 = scmp.ne.s32.totalorder %s82, %s96
      %p98 = scmp.eq.s32.totalorder %s30, 0
      %p99 = por %p97, %p98
      %s101 = sadd.s32 %s100, 1
      %p104 = scmp.eq.s32.totalorder %s24, 1
      %p105 = scmp.ne.s32.totalorder %s100, %s102
      %p106 = scmp.eq.s32.totalorder %s24, 0
      %p107 = por %p105, %p106
      %p108 = scmp.ne.s32.totalorder %s100, %s102
      %p109 = scmp.eq.s32.totalorder %s29, 1
      %p110 = por %p108, %p109
      %p111 = scmp.ne.s32.totalorder %s102, %s103
      %p112 = scmp.eq.s32.totalorder %s29, 0
      %p113 = por %p111, %p112
      %p114 = scmp.ne.s32.totalorder %s102, %s103
      %p115 = scmp.eq.s32.totalorder %s30, 1
      %p116 = por %p114, %p115
      %p118 = scmp.ne.s32.totalorder %s103, %s117
      %p119 = scmp.eq.s32.totalorder %s30, 0
      %p120 = por %p118, %p119
      %s122 = sadd.s32 %s121, 1
      %p125 = scmp.eq.s32.totalorder %s24, 1
      %p126 = scmp.ne.s32.totalorder %s121, %s123
      %p127 = scmp.eq.s32.totalorder %s24, 0
      %p128 = por %p126, %p127
      %p129 = scmp.ne.s32.totalorder %s121, %s123
      %p130 = scmp.eq.s32.totalorder %s29, 1
      %p131 = por %p129, %p130
      %p132 = scmp.ne.s32.totalorder %s123, %s124
      %p133 = scmp.eq.s32.totalorder %s29, 0
      %p134 = por %p132, %p133
      %p135 = scmp.ne.s32.totalorder %s123, %s124
      %p136 = scmp.eq.s32.totalorder %s30, 1
      %p137 = por %p135, %p136
      %p139 = scmp.ne.s32.totalorder %s124, %s138
      %p140 = scmp.eq.s32.totalorder %s30, 0
      %p141 = por %p139, %p140
      %s143 = sadd.s32 %s142, 1
      %p146 = scmp.eq.s32.totalorder %s24, 1
      %p147 = scmp.ne.s32.totalorder %s142, %s144
      %p148 = scmp.eq.s32.totalorder %s24, 0
      %p149 = por %p147, %p148
      %p150 = scmp.ne.s32.totalorder %s142, %s144
      %p151 = scmp.eq.s32.totalorder %s29, 1
      %p152 = por %p150, %p151
      %p153 = scmp.ne.s32.totalorder %s144, %s145
      %p154 = scmp.eq.s32.totalorder %s29, 0
      %p155 = por %p153, %p154
      %p156 = scmp.ne.s32.totalorder %s144, %s145
      %p157 = scmp.eq.s32.totalorder %s30, 1
      %p158 = por %p156, %p157
      %p160 = scmp.ne.s32.totalorder %s145, %s159
      %p161 = scmp.eq.s32.totalorder %s30, 0
      %p162 = por %p160, %p161
      %s164 = sadd.s32 %s163, 1
      %p167 = scmp.eq.s32.totalorder %s24, 1
      %p168 = scmp.ne.s32.totalorder %s163, %s165
      %p169 = scmp.eq.s32.totalorder %s24, 0
      %p170 = por %p168, %p169
      %p171 = scmp.ne.s32.totalorder %s163, %s165
      %p172 = scmp.eq.s32.totalorder %s29, 1
      %p173 = por %p171, %p172
      %p174 = scmp.ne.s32.totalorder %s165, %s166
      %p175 = scmp.eq.s32.totalorder %s29, 0
      %p176 = por %p174, %p175
      %p177 = scmp.ne.s32.totalorder %s165, %s166
      %p178 = scmp.eq.s32.totalorder %s30, 1
      %p179 = por %p177, %p178
      %p181 = scmp.ne.s32.totalorder %s166, %s180
      %p182 = scmp.eq.s32.totalorder %s30, 0
      %p183 = por %p181, %p182
      %s185 = sadd.s32 %s184, 1
      %p188 = scmp.eq.s32.totalorder %s24, 1
      %p189 = scmp.ne.s32.totalorder %s184, %s186
      %p190 = scmp.eq.s32.totalorder %s24, 0
      %p191 = por %p189, %p190
      %p192 = scmp.ne.s32.totalorder %s184, %s186
      %p193 = scmp.eq.s32.totalorder %s29, 1
      %p194 = por %p192, %p193
      %p195 = scmp.ne.s32.totalorder %s186, %s187
      %p196 = scmp.eq.s32.totalorder %s29, 0
      %p197 = por %p195, %p196
      %p198 = scmp.ne.s32.totalorder %s186, %s187
      %p199 = scmp.eq.s32.totalorder %s30, 1
      %p200 = por %p198, %p199
      %p202 = scmp.ne.s32.totalorder %s187, %s201
      %p203 = scmp.eq.s32.totalorder %s30, 0
      %p204 = por %p202, %p203
      %s206 = sadd.s32 %s205, 1
      %p209 = scmp.eq.s32.totalorder %s24, 1
      %p210 = scmp.ne.s32.totalorder %s205, %s207
      %p211 = scmp.eq.s32.totalorder %s24, 0
      %p212 = por %p210, %p211
      %p213 = scmp.ne.s32.totalorder %s205, %s207
      %p214 = scmp.eq.s32.totalorder %s29, 1
      %p215 = por %p213, %p214
      %p216 = scmp.ne.s32.totalorder %s207, %s208
      %p217 = scmp.eq.s32.totalorder %s29, 0
      %p218 = por %p216, %p217
      %p219 = scmp.ne.s32.totalorder %s207, %s208
      %p220 = scmp.eq.s32.totalorder %s30, 1
      %p221 = por %p219, %p220
      %p223 = scmp.ne.s32.totalorder %s208, %s222
      %p224 = scmp.eq.s32.totalorder %s30, 0
      %p225 = por %p223, %p224
      %s227 = sadd.s32 %s226, 1
      %p230 = scmp.eq.s32.totalorder %s24, 1
      %p231 = scmp.ne.s32.totalorder %s226, %s228
      %p232 = scmp.eq.s32.totalorder %s24, 0
      %p233 = por %p231, %p232
      %p234 = scmp.ne.s32.totalorder %s226, %s228
      %p235 = scmp.eq.s32.totalorder %s29, 1
      %p236 = por %p234, %p235
      %p237 = scmp.ne.s32.totalorder %s228, %s229
      %p238 = scmp.eq.s32.totalorder %s29, 0
      %p239 = por %p237, %p238
      %p240 = scmp.ne.s32.totalorder %s228, %s229
      %p241 = scmp.eq.s32.totalorder %s30, 1
      %p242 = por %p240, %p241
      %p244 = scmp.ne.s32.totalorder %s229, %s243
      %p245 = scmp.eq.s32.totalorder %s30, 0
      %p246 = por %p244, %p245
      %s248 = sadd.s32 %s247, 1
      %p251 = scmp.eq.s32.totalorder %s24, 1
      %p252 = scmp.ne.s32.totalorder %s247, %s249
      %p253 = scmp.eq.s32.totalorder %s24, 0
      %p254 = por %p252, %p253
      %p255 = scmp.ne.s32.totalorder %s247, %s249
      %p256 = scmp.eq.s32.totalorder %s29, 1
      %p257 = por %p255, %p256
      %p258 = scmp.ne.s32.totalorder %s249, %s250
      %p259 = scmp.eq.s32.totalorder %s29, 0
      %p260 = por %p258, %p259
      %p261 = scmp.ne.s32.totalorder %s249, %s250
      %p262 = scmp.eq.s32.totalorder %s30, 1
      %p263 = por %p261, %p262
      %p265 = scmp.ne.s32.totalorder %s250, %s264
      %p266 = scmp.eq.s32.totalorder %s30, 0
      %p267 = por %p265, %p266
      %s269 = sadd.s32 %s268, 1
      %p272 = scmp.eq.s32.totalorder %s24, 1
      %p273 = scmp.ne.s32.totalorder %s268, %s270
      %p274 = scmp.eq.s32.totalorder %s24, 0
      %p275 = por %p273, %p274
      %p276 = scmp.ne.s32.totalorder %s268, %s270
      %p277 = scmp.eq.s32.totalorder %s29, 1
      %p278 = por %p276, %p277
      %p279 = scmp.ne.s32.totalorder %s270, %s271
      %p280 = scmp.eq.s32.totalorder %s29, 0
      %p281 = por %p279, %p280
      %p282 = scmp.ne.s32.totalorder %s270, %s271
      %p283 = scmp.eq.s32.totalorder %s30, 1
      %p284 = por %p282, %p283
      %p286 = scmp.ne.s32.totalorder %s271, %s285
      %p287 = scmp.eq.s32.totalorder %s30, 0
      %p288 = por %p286, %p287
      %s289 = ssub.s32 %s24, %s31
      %p290 = scmp.eq.s32.totalorder %s289, 0
      %s292 = sadd.s32 %s291, 1
      %s293 = scalar_select %p290, %s291, %s292
      %p296 = pneg %p290
      %p297 = scmp.eq.s32.totalorder %s24, 1
      %p298 = por %p296, %p297
      %p299 = scmp.ne.s32.totalorder %s291, %s294
      %p300 = scmp.eq.s32.totalorder %s24, 0
      %p301 = por %p299, %p300
      %p302 = scmp.ne.s32.totalorder %s291, %s294
      %p303 = scmp.eq.s32.totalorder %s29, 1
      %p304 = por %p302, %p303
      %p305 = scmp.ne.s32.totalorder %s294, %s295
      %p306 = scmp.eq.s32.totalorder %s29, 0
      %p307 = por %p305, %p306
      %p308 = scmp.ne.s32.totalorder %s294, %s295
      %p309 = scmp.eq.s32.totalorder %s30, 1
      %p310 = por %p308, %p309
      %p312 = scmp.ne.s32.totalorder %s295, %s311
      %p313 = scmp.eq.s32.totalorder %s30, 0
      %p314 = por %p312, %p313
      %p315 = scmp.le.s32.totalorder 1, %s24
      %p316 = scmp.lt.s32.totalorder %s24, 3
      %p317 = pnand %p315, %p316
      %p318 = pneg %p317
      // Predicated region
      $region9: #{tpu_custom_call.1} parent=5 // pred_check
        _
      $region10: #{tpu_custom_call.1} parent=5 // pred_check_branch
        %320 = sbr.rel (%p317) target = $region12
      $region11: #{tpu_custom_call.1} parent=5 // pred_region
        %s321 = ssub.s32 %s24, 1
        // Predicated region
        $region13: #{tpu_custom_call.1} parent=11 // pred_check
          %p322 = pneg %p71
        $region14: #{tpu_custom_call.1} parent=11 // pred_check_branch
          %324 = sbr.rel (%p322) target = $region16
        $region15: #{tpu_custom_call.1} parent=11 // pred_region
          _
        $region16: #{tpu_custom_call.1} parent=11 // pred_fallthru
          _
        // Predicated region
        $region17: #{tpu_custom_call.1} parent=11 // pred_check
          %p325 = pneg %p92
        $region18: #{tpu_custom_call.1} parent=11 // pred_check_branch
          %327 = sbr.rel (%p325) target = $region20
        $region19: #{tpu_custom_call.1} parent=11 // pred_region
          _
        $region20: #{tpu_custom_call.1} parent=11 // pred_fallthru
          _
        // Predicated region
        $region21: #{tpu_custom_call.1} parent=11 // pred_check
          %p328 = pneg %p113
        $region22: #{tpu_custom_call.1} parent=11 // pred_check_branch
          %330 = sbr.rel (%p328) target = $region24
        $region23: #{tpu_custom_call.1} parent=11 // pred_region
          %s332 = ssub.s32 256, 256
          %333 = vsyncadd [#allocation3], %s332
          %s334 = sshll.u32 [#allocation2], 4
          %s335 = int_to_ptr.vmem [resolvable:$true] %s334
          %340 = dma.hbm_to_vmem [thread:$0]  %s3, 256, %s335, [#allocation3], 64, 64, 4
        $region24: #{tpu_custom_call.1} parent=11 // pred_fallthru
          _
        // Predicated region
        $region25: #{tpu_custom_call.1} parent=11 // pred_check
          %p341 = pneg %p134
        $region26: #{tpu_custom_call.1} parent=11 // pred_check_branch
          %343 = sbr.rel (%p341) target = $region28
        $region27: #{tpu_custom_call.1} parent=11 // pred_region
          %s345 = ssub.s32 256, 256
          %346 = vsyncadd [#allocation6], %s345
          %s347 = sshll.u32 [#allocation5], 4
          %s348 = int_to_ptr.vmem [resolvable:$true] %s347
          %353 = dma.hbm_to_vmem [thread:$0]  %s4, 256, %s348, [#allocation6], 64, 64, 4
        $region28: #{tpu_custom_call.1} parent=11 // pred_fallthru
          _
        // Predicated region
        $region29: #{tpu_custom_call.1} parent=11 // pred_check
          %p354 = pneg %p155
        $region30: #{tpu_custom_call.1} parent=11 // pred_check_branch
          %356 = sbr.rel (%p354) target = $region32
        $region31: #{tpu_custom_call.1} parent=11 // pred_region
          %s358 = ssub.s32 256, 256
          %359 = vsyncadd [#allocation6], %s358
          %s360 = sshll.u32 [#allocation7], 4
          %s361 = int_to_ptr.vmem [resolvable:$true] %s360
          %366 = dma.hbm_to_vmem [thread:$0]  %s5, 256, %s361, [#allocation6], 64, 64, 4
        $region32: #{tpu_custom_call.1} parent=11 // pred_fallthru
          _
        // Predicated region
        $region33: #{tpu_custom_call.1} parent=11 // pred_check
          %p367 = pneg %p176
        $region34: #{tpu_custom_call.1} parent=11 // pred_check_branch
          %369 = sbr.rel (%p367) target = $region36
        $region35: #{tpu_custom_call.1} parent=11 // pred_region
          %s371 = ssub.s32 256, 256
          %372 = vsyncadd [#allocation9], %s371
          %s373 = sshll.u32 [#allocation8], 4
          %s374 = int_to_ptr.vmem [resolvable:$true] %s373
          %379 = dma.hbm_to_vmem [thread:$0]  %s6, 256, %s374, [#allocation9], 64, 64, 4
        $region36: #{tpu_custom_call.1} parent=11 // pred_fallthru
          _
        // Predicated region
        $region37: #{tpu_custom_call.1} parent=11 // pred_check
          %p380 = pneg %p197
        $region38: #{tpu_custom_call.1} parent=11 // pred_check_branch
          %382 = sbr.rel (%p380) target = $region40
        $region39: #{tpu_custom_call.1} parent=11 // pred_region
          _
        $region40: #{tpu_custom_call.1} parent=11 // pred_fallthru
          _
        // Predicated region
        $region41: #{tpu_custom_call.1} parent=11 // pred_check
          %p383 = pneg %p218
        $region42: #{tpu_custom_call.1} parent=11 // pred_check_branch
          %385 = sbr.rel (%p383) target = $region44
        $region43: #{tpu_custom_call.1} parent=11 // pred_region
          _
        $region44: #{tpu_custom_call.1} parent=11 // pred_fallthru
          _
        // Predicated region
        $region45: #{tpu_custom_call.1} parent=11 // pred_check
          %p386 = pneg %p239
        $region46: #{tpu_custom_call.1} parent=11 // pred_check_branch
          %388 = sbr.rel (%p386) target = $region48
        $region47: #{tpu_custom_call.1} parent=11 // pred_region
          _
        $region48: #{tpu_custom_call.1} parent=11 // pred_fallthru
          _
        // Predicated region
        $region49: #{tpu_custom_call.1} parent=11 // pred_check
          %p389 = pneg %p260
        $region50: #{tpu_custom_call.1} parent=11 // pred_check_branch
          %391 = sbr.rel (%p389) target = $region52
        $region51: #{tpu_custom_call.1} parent=11 // pred_region
          _
        $region52: #{tpu_custom_call.1} parent=11 // pred_fallthru
          _
        // Predicated region
        $region53: #{tpu_custom_call.1} parent=11 // pred_check
          %p392 = pneg %p281
        $region54: #{tpu_custom_call.1} parent=11 // pred_check_branch
          %394 = sbr.rel (%p392) target = $region56
        $region55: #{tpu_custom_call.1} parent=11 // pred_region
          _
        $region56: #{tpu_custom_call.1} parent=11 // pred_fallthru
          _
      $region12: #{tpu_custom_call.1} parent=5 // pred_fallthru
        _
      %p395 = scmp.lt.s32.totalorder %s24, 2
      // Predicated region
      $region57: #{tpu_custom_call.1} parent=5 // pred_check
        %p396 = pneg %p395
      $region58: #{tpu_custom_call.1} parent=5 // pred_check_branch
        %398 = sbr.rel (%p396) target = $region60
      $region59: #{tpu_custom_call.1} parent=5 // pred_region
        // Predicated region
        $region61: #{tpu_custom_call.1} parent=59 // pred_check
          %p399 = pneg %p44
        $region62: #{tpu_custom_call.1} parent=59 // pred_check_branch
          %401 = sbr.rel (%p399) target = $region64
        $region63: #{tpu_custom_call.1} parent=59 // pred_region
          %p402 = scmp.lt.s32.totalorder %s24, 1
          %s403 = scalar_select %p402, %s24, 1
          %s404 = smul.addr %s403, 8
          %s405 = scalar_lea.vmem %s0, %s404
        $region64: #{tpu_custom_call.1} parent=59 // pred_fallthru
          _
      $region60: #{tpu_custom_call.1} parent=5 // pred_fallthru
        _
      %p406 = scmp.le.s32.totalorder 1, %s24
      %p407 = scmp.lt.s32.totalorder %s24, 3
      %p408 = pnand %p406, %p407
      %p409 = pneg %p408
      // Predicated region
      $region65: #{tpu_custom_call.1} parent=5 // pred_check
        _
      $region66: #{tpu_custom_call.1} parent=5 // pred_check_branch
        %411 = sbr.rel (%p408) target = $region68
      $region67: #{tpu_custom_call.1} parent=5 // pred_region
        %s412 = ssub.s32 %s24, 1
        // Predicated region
        $region69: #{tpu_custom_call.1} parent=67 // pred_check
          %p413 = pneg %p113
        $region70: #{tpu_custom_call.1} parent=67 // pred_check_branch
          %415 = sbr.rel (%p413) target = $region72
        $region71: #{tpu_custom_call.1} parent=67 // pred_region
          %416 = dma.done [#allocation3], 256
        $region72: #{tpu_custom_call.1} parent=67 // pred_fallthru
          _
        // Predicated region
        $region73: #{tpu_custom_call.1} parent=67 // pred_check
          %p417 = pneg %p134
        $region74: #{tpu_custom_call.1} parent=67 // pred_check_branch
          %419 = sbr.rel (%p417) target = $region76
        $region75: #{tpu_custom_call.1} parent=67 // pred_region
          %420 = dma.done [#allocation6], 256
        $region76: #{tpu_custom_call.1} parent=67 // pred_fallthru
          _
        // Predicated region
        $region77: #{tpu_custom_call.1} parent=67 // pred_check
          %p421 = pneg %p155
        $region78: #{tpu_custom_call.1} parent=67 // pred_check_branch
          %423 = sbr.rel (%p421) target = $region80
        $region79: #{tpu_custom_call.1} parent=67 // pred_region
          %424 = dma.done [#allocation6], 256
        $region80: #{tpu_custom_call.1} parent=67 // pred_fallthru
          _
        // Predicated region
        $region81: #{tpu_custom_call.1} parent=67 // pred_check
          %p425 = pneg %p176
        $region82: #{tpu_custom_call.1} parent=67 // pred_check_branch
          %427 = sbr.rel (%p425) target = $region84
        $region83: #{tpu_custom_call.1} parent=67 // pred_region
          %428 = dma.done [#allocation9], 256
        $region84: #{tpu_custom_call.1} parent=67 // pred_fallthru
          _
        %p429 = scmp.lt.s32.totalorder %s29, 1
        %s430 = scalar_select %p429, %s29, 1
        %s431 = smul.addr %s430, 8
        %s432 = scalar_lea.vmem %s0, %s431
        %p433 = pneg %p50
        %p434 = pneg %p47
        %p435 = pneg %p71
        %p436 = pneg %p68
        %p437 = pneg %p92
        %p438 = pneg %p89
        %p439 = pneg %p113
        %p440 = pneg %p110
        %p441 = pneg %p134
        %p442 = pneg %p131
        %p443 = pneg %p155
        %p444 = pneg %p152
        %p445 = pneg %p176
        %p446 = pneg %p173
        %p447 = pneg %p197
        %p448 = pneg %p194
        %p449 = pneg %p218
        %p450 = pneg %p215
        %p451 = pneg %p239
        %p452 = pneg %p236
        %p453 = pneg %p260
        %p454 = pneg %p257
        %p455 = pneg %p281
        %p456 = pneg %p278
        %p457 = pneg %p307
        %p458 = pneg %p304
        %s459 = sand.u32 %s294, 1
        %s460 = scalar_lea.sflag [#allocation4], %s459
        %s461 = sand.u32 %s294, 1
        %s462 = smul.addr %s461, 8
        %s463 = scalar_lea.vmem [#allocation10], %s462
        %p464 = scmp.lt.s32.totalorder %s29, 1
        %s465 = scalar_select %p464, %s29, 1
        %s466 = smul.addr %s465, 8
        %s467 = scalar_lea.vmem %s0, %s466
        %v469 = vld [vmem:[%s467] sm:$0xff]
        %v470 = vmul.f32 %v469, %v469
        %vm471 = vcmask 261120
        %v472 = vsel %vm471, %v470, 0.0
        %473 = vadd.xlane.f32.xlu0 %v472
        %v474 = vpop.xlane.xlu0 %473
        %v475 = vrcp.pop 32.0
        %v476 = vmul.f32 %v474, %v475
        %v477 = vadd.f32 %v476, 1e-05
        %v478 = vrsqrt.pop %v477
        %v479 = vmul.f32 %v469, %v478
        %v480 = vld [vmem:[%s8] sm:$0x1]
        %v482 = vlaneseq
        %v483 = vshrl.u32 %v482, 7
        %v484 = vsub.s32 0, %v483
        %v485 = vrot.slane %v480, %v484
        %v487 = vmul.f32 %v479, %v485
        %v488 = vpack.c.bf16 %v487, %v487
        %v489 = vld [vmem:[%s1] sm:$0xf]
        %v490 = vld [vmem:[%s1 + $0x4] sm:$0xf]
        %v491 = vld [vmem:[%s1 + $0x8] sm:$0xf]
        %v492 = vld [vmem:[%s1 + $0xc] sm:$0xf]
        %v497 = vunpack.c.l.b16 %v489
        %v498 = vunpack.c.l.b16 %v490
        %v499 = vunpack.c.l.b16 %v491
        %v500 = vunpack.c.l.b16 %v492
        %v501 = vpack.c.b16 %v498, %v497
        %v502 = vpack.c.b16 %v500, %v499
        %v506 = vsel %vm471, %v488, 0
        %508 = vmatprep.subr.bf16.mxu0 0
        %509 = vmatpush1.bf16.msra.mxu0 %v501
        %510 = vmatprep.subr.bf16.mxu0 0
        %511 = vmatpush1.bf16.msra.mxu0 %v502
        %512 = vmatprep.subr.bf16.mxu0 0
        %513 = vmatpush1.bf16.msra.mxu0 0
        %514 = vmatprep.subr.bf16.mxu0 0
        %515 = vmatpush1.bf16.msra.mxu0 0
        %516 = vmatprep.subr.bf16.mxu0 0
        %517 = vmatpush1.bf16.msra.mxu0 0
        %518 = vmatprep.subr.bf16.mxu0 0
        %519 = vmatpush1.bf16.msra.mxu0 0
        %520 = vmatprep.subr.bf16.mxu0 0
        %521 = vmatpush1.bf16.msra.mxu0 0
        %522 = vmatprep.subr.bf16.mxu0 0
        %523 = vmatpush1.bf16.msra.mxu0 0
        %524 = vmatprep.subr.bf16.mxu0 0
        %525 = vmatpush1.bf16.msra.mxu0 0
        %526 = vmatprep.subr.bf16.mxu0 0
        %527 = vmatpush1.bf16.msra.mxu0 0
        %528 = vmatprep.subr.bf16.mxu0 0
        %529 = vmatpush1.bf16.msra.mxu0 0
        %530 = vmatprep.subr.bf16.mxu0 0
        %531 = vmatpush1.bf16.msra.mxu0 0
        %532 = vmatprep.subr.bf16.mxu0 0
        %533 = vmatpush1.bf16.msra.mxu0 0
        %534 = vmatprep.subr.bf16.mxu0 0
        %535 = vmatpush1.bf16.msra.mxu0 0
        %536 = vmatprep.subr.bf16.mxu0 0
        %537 = vmatpush1.bf16.msra.mxu0 0
        %538 = vmatprep.subr.bf16.mxu0 0
        %539 = vmatpush1.bf16.msra.mxu0 0
        %540 = vmatprep.mubr.bf16.mxu0 0
        %541 = vmatmul.mubr.bf16.gmra.mrb[0].mxu0 %v506
        %v542 = vpop.f32.mrb[0].mxu0
        %v543 = vadd.f32 0.0, %v542
        %v544 = vpop.f32.mrb[0].mxu0
        %v545 = vpop.f32.mrb[0].mxu0
        %v546 = vpop.f32.mrb[0].mxu0
        %547 = vdwg.mxu0
        %v548 = vld [vmem:[%s2] sm:$0xf]
        %v549 = vld [vmem:[%s2 + $0x4] sm:$0xf]
        %v550 = vld [vmem:[%s2 + $0x8] sm:$0xf]
        %v551 = vld [vmem:[%s2 + $0xc] sm:$0xf]
        %v556 = vunpack.c.l.b16 %v548
        %v557 = vunpack.c.l.b16 %v549
        %v558 = vunpack.c.l.b16 %v550
        %v559 = vunpack.c.l.b16 %v551
        %v560 = vpack.c.b16 %v557, %v556
        %v561 = vpack.c.b16 %v559, %v558
        %564 = vmatprep.subr.bf16.mxu0 0
        %565 = vmatpush1.bf16.msra.mxu0 %v560
        %566 = vmatprep.subr.bf16.mxu0 0
        %567 = vmatpush1.bf16.msra.mxu0 %v561
        %568 = vmatprep.subr.bf16.mxu0 0
        %569 = vmatpush1.bf16.msra.mxu0 0
        %570 = vmatprep.subr.bf16.mxu0 0
        %571 = vmatpush1.bf16.msra.mxu0 0
        %572 = vmatprep.subr.bf16.mxu0 0
        %573 = vmatpush1.bf16.msra.mxu0 0
        %574 = vmatprep.subr.bf16.mxu0 0
        %575 = vmatpush1.bf16.msra.mxu0 0
        %576 = vmatprep.subr.bf16.mxu0 0
        %577 = vmatpush1.bf16.msra.mxu0 0
        %578 = vmatprep.subr.bf16.mxu0 0
        %579 = vmatpush1.bf16.msra.mxu0 0
        %580 = vmatprep.subr.bf16.mxu0 0
        %581 = vmatpush1.bf16.msra.mxu0 0
        %582 = vmatprep.subr.bf16.mxu0 0
        %583 = vmatpush1.bf16.msra.mxu0 0
        %584 = vmatprep.subr.bf16.mxu0 0
        %585 = vmatpush1.bf16.msra.mxu0 0
        %586 = vmatprep.subr.bf16.mxu0 0
        %587 = vmatpush1.bf16.msra.mxu0 0
        %588 = vmatprep.subr.bf16.mxu0 0
        %589 = vmatpush1.bf16.msra.mxu0 0
        %590 = vmatprep.subr.bf16.mxu0 0
        %591 = vmatpush1.bf16.msra.mxu0 0
        %592 = vmatprep.subr.bf16.mxu0 0
        %593 = vmatpush1.bf16.msra.mxu0 0
        %594 = vmatprep.subr.bf16.mxu0 0
        %595 = vmatpush1.bf16.msra.mxu0 0
        %596 = vmatprep.mubr.bf16.mxu0 0
        %597 = vmatmul.mubr.bf16.gmra.mrb[0].mxu0 %v506
        %v598 = vpop.f32.mrb[0].mxu0
        %v599 = vadd.f32 0.0, %v598
        %v600 = vpop.f32.mrb[0].mxu0
        %v601 = vpop.f32.mrb[0].mxu0
        %v602 = vpop.f32.mrb[0].mxu0
        %603 = vdwg.mxu0
        %v604 = vld [vmem:[#allocation2] sm:$0xf]
        %v605 = vld [vmem:[#allocation2 + $0x4] sm:$0xf]
        %v606 = vld [vmem:[#allocation2 + $0x8] sm:$0xf]
        %v607 = vld [vmem:[#allocation2 + $0xc] sm:$0xf]
        %v612 = vunpack.c.l.b16 %v604
        %v613 = vunpack.c.l.b16 %v605
        %v614 = vunpack.c.l.b16 %v606
        %v615 = vunpack.c.l.b16 %v607
        %v616 = vpack.c.b16 %v613, %v612
        %v617 = vpack.c.b16 %v615, %v614
        %620 = vmatprep.subr.bf16.mxu0 0
        %621 = vmatpush1.bf16.msra.mxu0 %v616
        %622 = vmatprep.subr.bf16.mxu0 0
        %623 = vmatpush1.bf16.msra.mxu0 %v617
        %624 = vmatprep.subr.bf16.mxu0 0
        %625 = vmatpush1.bf16.msra.mxu0 0
        %626 = vmatprep.subr.bf16.mxu0 0
        %627 = vmatpush1.bf16.msra.mxu0 0
        %628 = vmatprep.subr.bf16.mxu0 0
        %629 = vmatpush1.bf16.msra.mxu0 0
        %630 = vmatprep.subr.bf16.mxu0 0
        %631 = vmatpush1.bf16.msra.mxu0 0
        %632 = vmatprep.subr.bf16.mxu0 0
        %633 = vmatpush1.bf16.msra.mxu0 0
        %634 = vmatprep.subr.bf16.mxu0 0
        %635 = vmatpush1.bf16.msra.mxu0 0
        %636 = vmatprep.subr.bf16.mxu0 0
        %637 = vmatpush1.bf16.msra.mxu0 0
        %638 = vmatprep.subr.bf16.mxu0 0
        %639 = vmatpush1.bf16.msra.mxu0 0
        %640 = vmatprep.subr.bf16.mxu0 0
        %641 = vmatpush1.bf16.msra.mxu0 0
        %642 = vmatprep.subr.bf16.mxu0 0
        %643 = vmatpush1.bf16.msra.mxu0 0
        %644 = vmatprep.subr.bf16.mxu0 0
        %645 = vmatpush1.bf16.msra.mxu0 0
        %646 = vmatprep.subr.bf16.mxu0 0
        %647 = vmatpush1.bf16.msra.mxu0 0
        %648 = vmatprep.subr.bf16.mxu0 0
        %649 = vmatpush1.bf16.msra.mxu0 0
        %650 = vmatprep.subr.bf16.mxu0 0
        %651 = vmatpush1.bf16.msra.mxu0 0
        %652 = vmatprep.mubr.bf16.mxu0 0
        %653 = vmatmul.mubr.bf16.gmra.mrb[0].mxu0 %v506
        %v654 = vpop.f32.mrb[0].mxu0
        %v655 = vadd.f32 0.0, %v654
        %v656 = vpop.f32.mrb[0].mxu0
        %v657 = vpop.f32.mrb[0].mxu0
        %v658 = vpop.f32.mrb[0].mxu0
        %659 = vdwg.mxu0
        %661 = vrot.lane.b32.xlu0 %v543, 120
        %v662 = vpop.permute.xlu0 %661
        %664 = vrot.lane.b32.xlu0 %v543, 112
        %v665 = vpop.permute.xlu0 %664
        %667 = vrot.lane.b32.xlu0 %v543, 104
        %v668 = vpop.permute.xlu0 %667
        %671 = vrot.lane.b32.xlu0 %v599, 120
        %v672 = vpop.permute.xlu0 %671
        %674 = vrot.lane.b32.xlu0 %v599, 112
        %v675 = vpop.permute.xlu0 %674
        %677 = vrot.lane.b32.xlu0 %v599, 104
        %v678 = vpop.permute.xlu0 %677
        %681 = vrot.lane.b32.xlu0 %v655, 120
        %v682 = vpop.permute.xlu0 %681
        %684 = vrot.lane.b32.xlu0 %v655, 112
        %v685 = vpop.permute.xlu0 %684
        %687 = vrot.lane.b32.xlu0 %v655, 104
        %v688 = vpop.permute.xlu0 %687
        %v690 = vpack.c.bf16 %v655, %v655
        %v691 = vpack.c.bf16 %v682, %v682
        %v692 = vpack.c.bf16 %v685, %v685
        %v693 = vpack.c.bf16 %v688, %v688
        %v694 = vld [vmem:[%s10] sm:$0xff]
        %v695 = vld [vmem:[%s11] sm:$0xff]
        %v696 = vsub.f32 0.0, %v543
        %v697 = vsub.f32 0.0, %v662
        %v698 = vsub.f32 0.0, %v665
        %v699 = vsub.f32 0.0, %v668
        %704 = vrot.lane.b32.xlu0 %v696, 124
        %v705 = vpop.permute.xlu0 %704
        %706 = vrot.lane.b32.xlu0 %v697, 124
        %v707 = vpop.permute.xlu0 %706
        %708 = vrot.lane.b32.xlu0 %v698, 124
        %v709 = vpop.permute.xlu0 %708
        %710 = vrot.lane.b32.xlu0 %v699, 124
        %v711 = vpop.permute.xlu0 %710
        %716 = vrot.lane.b32.xlu0 %v543, 4
        %v717 = vpop.permute.xlu0 %716
        %718 = vrot.lane.b32.xlu0 %v662, 4
        %v719 = vpop.permute.xlu0 %718
        %720 = vrot.lane.b32.xlu0 %v665, 4
        %v721 = vpop.permute.xlu0 %720
        %722 = vrot.lane.b32.xlu0 %v668, 4
        %v723 = vpop.permute.xlu0 %722
        %vm728 = vcmask 31744
        %v729 = vsel %vm728, %v705, %v717
        %v730 = vsel %vm728, %v707, %v719
        %v731 = vsel %vm728, %v709, %v721
        %v732 = vsel %vm728, %v711, %v723
        %v733 = vmul.f32 %v543, %v694
        %v734 = vmul.f32 %v662, %v694
        %v735 = vmul.f32 %v665, %v694
        %v736 = vmul.f32 %v668, %v694
        %v737 = vmul.f32 %v729, %v695
        %v738 = vmul.f32 %v730, %v695
        %v739 = vmul.f32 %v731, %v695
        %v740 = vmul.f32 %v732, %v695
        %v741 = vadd.f32 %v733, %v737
        %v742 = vadd.f32 %v734, %v738
        %v743 = vadd.f32 %v735, %v739
        %v744 = vadd.f32 %v736, %v740
        %v745 = vmul.f32 %v741, 0.35355338
        %v746 = vmul.f32 %v742, 0.35355338
        %v747 = vmul.f32 %v743, 0.35355338
        %v748 = vmul.f32 %v744, 0.35355338
        %v749 = vpack.c.bf16 %v745, %v745
        %v750 = vpack.c.bf16 %v746, %v746
        %v751 = vpack.c.bf16 %v747, %v747
        %v752 = vpack.c.bf16 %v748, %v748
        %v753 = vsub.f32 0.0, %v599
        %v754 = vsub.f32 0.0, %v672
        %v755 = vsub.f32 0.0, %v675
        %v756 = vsub.f32 0.0, %v678
        %761 = vrot.lane.b32.xlu0 %v753, 124
        %v762 = vpop.permute.xlu0 %761
        %763 = vrot.lane.b32.xlu0 %v754, 124
        %v764 = vpop.permute.xlu0 %763
        %765 = vrot.lane.b32.xlu0 %v755, 124
        %v766 = vpop.permute.xlu0 %765
        %767 = vrot.lane.b32.xlu0 %v756, 124
        %v768 = vpop.permute.xlu0 %767
        %773 = vrot.lane.b32.xlu0 %v599, 4
        %v774 = vpop.permute.xlu0 %773
        %775 = vrot.lane.b32.xlu0 %v672, 4
        %v776 = vpop.permute.xlu0 %775
        %777 = vrot.lane.b32.xlu0 %v675, 4
        %v778 = vpop.permute.xlu0 %777
        %779 = vrot.lane.b32.xlu0 %v678, 4
        %v780 = vpop.permute.xlu0 %779
        %v785 = vsel %vm728, %v762, %v774
        %v786 = vsel %vm728, %v764, %v776
        %v787 = vsel %vm728, %v766, %v778
        %v788 = vsel %vm728, %v768, %v780
        %v789 = vmul.f32 %v599, %v694
        %v790 = vmul.f32 %v672, %v694
        %v791 = vmul.f32 %v675, %v694
        %v792 = vmul.f32 %v678, %v694
        %v793 = vmul.f32 %v785, %v695
        %v794 = vmul.f32 %v786, %v695
        %v795 = vmul.f32 %v787, %v695
        %v796 = vmul.f32 %v788, %v695
        %v797 = vadd.f32 %v789, %v793
        %v798 = vadd.f32 %v790, %v794
        %v799 = vadd.f32 %v791, %v795
        %v800 = vadd.f32 %v792, %v796
        %v801 = vpack.c.bf16 %v797, %v797
        %v802 = vpack.c.bf16 %v798, %v798
        %v803 = vpack.c.bf16 %v799, %v799
        %v804 = vpack.c.bf16 %v800, %v800
        %vm805 = vcmask 64512
        %v807 = vsel %vm805, %v749, 0
        %v810 = vsel %vm805, %v801, 0
        %812 = vmatprep.subr.bf16.mxu0 0
        %813 = vmatpush1.bf16.xpose.msra.mxu0 %v810
        %814 = vmatprep.subr.bf16.mxu0 0
        %815 = vmatpush1.bf16.xpose.msra.mxu0 0
        %816 = vmatprep.subr.bf16.mxu0 0
        %817 = vmatpush1.bf16.xpose.msra.mxu0 0
        %818 = vmatprep.subr.bf16.mxu0 0
        %819 = vmatpush1.bf16.xpose.msra.mxu0 0
        %820 = vmatprep.subr.bf16.mxu0 0
        %821 = vmatpush1.bf16.xpose.msra.mxu0 0
        %822 = vmatprep.subr.bf16.mxu0 0
        %823 = vmatpush1.bf16.xpose.msra.mxu0 0
        %824 = vmatprep.subr.bf16.mxu0 0
        %825 = vmatpush1.bf16.xpose.msra.mxu0 0
        %826 = vmatprep.subr.bf16.mxu0 0
        %827 = vmatpush1.bf16.xpose.msra.mxu0 0
        %828 = vmatprep.subr.bf16.mxu0 0
        %829 = vmatpush1.bf16.xpose.msra.mxu0 0
        %830 = vmatprep.subr.bf16.mxu0 0
        %831 = vmatpush1.bf16.xpose.msra.mxu0 0
        %832 = vmatprep.subr.bf16.mxu0 0
        %833 = vmatpush1.bf16.xpose.msra.mxu0 0
        %834 = vmatprep.subr.bf16.mxu0 0
        %835 = vmatpush1.bf16.xpose.msra.mxu0 0
        %836 = vmatprep.subr.bf16.mxu0 0
        %837 = vmatpush1.bf16.xpose.msra.mxu0 0
        %838 = vmatprep.subr.bf16.mxu0 0
        %839 = vmatpush1.bf16.xpose.msra.mxu0 0
        %840 = vmatprep.subr.bf16.mxu0 0
        %841 = vmatpush1.bf16.xpose.msra.mxu0 0
        %842 = vmatprep.subr.bf16.mxu0 0
        %843 = vmatpush1.bf16.xpose.msra.mxu0 0
        %844 = vmatprep.mubr.bf16.mxu0 0
        %845 = vmatmul.mubr.bf16.gmra.mrb[0].mxu0 %v807
        %v846 = vpop.f32.mrb[0].mxu0
        %v847 = vadd.f32 0.0, %v846
        %v848 = vpop.f32.mrb[0].mxu0
        %v849 = vpop.f32.mrb[0].mxu0
        %v850 = vpop.f32.mrb[0].mxu0
        %851 = vdwg.mxu0
        %v853 = vsel %vm805, %v750, 0
        %v856 = vsel %vm805, %v802, 0
        %858 = vmatprep.subr.bf16.mxu0 0
        %859 = vmatpush1.bf16.xpose.msra.mxu0 %v856
        %860 = vmatprep.subr.bf16.mxu0 0
        %861 = vmatpush1.bf16.xpose.msra.mxu0 0
        %862 = vmatprep.subr.bf16.mxu0 0
        %863 = vmatpush1.bf16.xpose.msra.mxu0 0
        %864 = vmatprep.subr.bf16.mxu0 0
        %865 = vmatpush1.bf16.xpose.msra.mxu0 0
        %866 = vmatprep.subr.bf16.mxu0 0
        %867 = vmatpush1.bf16.xpose.msra.mxu0 0
        %868 = vmatprep.subr.bf16.mxu0 0
        %869 = vmatpush1.bf16.xpose.msra.mxu0 0
        %870 = vmatprep.subr.bf16.mxu0 0
        %871 = vmatpush1.bf16.xpose.msra.mxu0 0
        %872 = vmatprep.subr.bf16.mxu0 0
        %873 = vmatpush1.bf16.xpose.msra.mxu0 0
        %874 = vmatprep.subr.bf16.mxu0 0
        %875 = vmatpush1.bf16.xpose.msra.mxu0 0
        %876 = vmatprep.subr.bf16.mxu0 0
        %877 = vmatpush1.bf16.xpose.msra.mxu0 0
        %878 = vmatprep.subr.bf16.mxu0 0
        %879 = vmatpush1.bf16.xpose.msra.mxu0 0
        %880 = vmatprep.subr.bf16.mxu0 0
        %881 = vmatpush1.bf16.xpose.msra.mxu0 0
        %882 = vmatprep.subr.bf16.mxu0 0
        %883 = vmatpush1.bf16.xpose.msra.mxu0 0
        %884 = vmatprep.subr.bf16.mxu0 0
        %885 = vmatpush1.bf16.xpose.msra.mxu0 0
        %886 = vmatprep.subr.bf16.mxu0 0
        %887 = vmatpush1.bf16.xpose.msra.mxu0 0
        %888 = vmatprep.subr.bf16.mxu0 0
        %889 = vmatpush1.bf16.xpose.msra.mxu0 0
        %890 = vmatprep.mubr.bf16.mxu0 0
        %891 = vmatmul.mubr.bf16.gmra.mrb[0].mxu0 %v853
        %v892 = vpop.f32.mrb[0].mxu0
        %v893 = vadd.f32 0.0, %v892
        %v894 = vpop.f32.mrb[0].mxu0
        %v895 = vpop.f32.mrb[0].mxu0
        %v896 = vpop.f32.mrb[0].mxu0
        %897 = vdwg.mxu0
        %v899 = vsel %vm805, %v751, 0
        %v902 = vsel %vm805, %v803, 0
        %904 = vmatprep.subr.bf16.mxu0 0
        %905 = vmatpush1.bf16.xpose.msra.mxu0 %v902
        %906 = vmatprep.subr.bf16.mxu0 0
        %907 = vmatpush1.bf16.xpose.msra.mxu0 0
        %908 = vmatprep.subr.bf16.mxu0 0
        %909 = vmatpush1.bf16.xpose.msra.mxu0 0
        %910 = vmatprep.subr.bf16.mxu0 0
        %911 = vmatpush1.bf16.xpose.msra.mxu0 0
        %912 = vmatprep.subr.bf16.mxu0 0
        %913 = vmatpush1.bf16.xpose.msra.mxu0 0
        %914 = vmatprep.subr.bf16.mxu0 0
        %915 = vmatpush1.bf16.xpose.msra.mxu0 0
        %916 = vmatprep.subr.bf16.mxu0 0
        %917 = vmatpush1.bf16.xpose.msra.mxu0 0
        %918 = vmatprep.subr.bf16.mxu0 0
        %919 = vmatpush1.bf16.xpose.msra.mxu0 0
        %920 = vmatprep.subr.bf16.mxu0 0
        %921 = vmatpush1.bf16.xpose.msra.mxu0 0
        %922 = vmatprep.subr.bf16.mxu0 0
        %923 = vmatpush1.bf16.xpose.msra.mxu0 0
        %924 = vmatprep.subr.bf16.mxu0 0
        %925 = vmatpush1.bf16.xpose.msra.mxu0 0
        %926 = vmatprep.subr.bf16.mxu0 0
        %927 = vmatpush1.bf16.xpose.msra.mxu0 0
        %928 = vmatprep.subr.bf16.mxu0 0
        %929 = vmatpush1.bf16.xpose.msra.mxu0 0
        %930 = vmatprep.subr.bf16.mxu0 0
        %931 = vmatpush1.bf16.xpose.msra.mxu0 0
        %932 = vmatprep.subr.bf16.mxu0 0
        %933 = vmatpush1.bf16.xpose.msra.mxu0 0
        %934 = vmatprep.subr.bf16.mxu0 0
        %935 = vmatpush1.bf16.xpose.msra.mxu0 0
        %936 = vmatprep.mubr.bf16.mxu0 0
        %937 = vmatmul.mubr.bf16.gmra.mrb[0].mxu0 %v899
        %v938 = vpop.f32.mrb[0].mxu0
        %v939 = vadd.f32 0.0, %v938
        %v940 = vpop.f32.mrb[0].mxu0
        %v941 = vpop.f32.mrb[0].mxu0
        %v942 = vpop.f32.mrb[0].mxu0
        %943 = vdwg.mxu0
        %v945 = vsel %vm805, %v752, 0
        %v948 = vsel %vm805, %v804, 0
        %950 = vmatprep.subr.bf16.mxu0 0
        %951 = vmatpush1.bf16.xpose.msra.mxu0 %v948
        %952 = vmatprep.subr.bf16.mxu0 0
        %953 = vmatpush1.bf16.xpose.msra.mxu0 0
        %954 = vmatprep.subr.bf16.mxu0 0
        %955 = vmatpush1.bf16.xpose.msra.mxu0 0
        %956 = vmatprep.subr.bf16.mxu0 0
        %957 = vmatpush1.bf16.xpose.msra.mxu0 0
        %958 = vmatprep.subr.bf16.mxu0 0
        %959 = vmatpush1.bf16.xpose.msra.mxu0 0
        %960 = vmatprep.subr.bf16.mxu0 0
        %961 = vmatpush1.bf16.xpose.msra.mxu0 0
        %962 = vmatprep.subr.bf16.mxu0 0
        %963 = vmatpush1.bf16.xpose.msra.mxu0 0
        %964 = vmatprep.subr.bf16.mxu0 0
        %965 = vmatpush1.bf16.xpose.msra.mxu0 0
        %966 = vmatprep.subr.bf16.mxu0 0
        %967 = vmatpush1.bf16.xpose.msra.mxu0 0
        %968 = vmatprep.subr.bf16.mxu0 0
        %969 = vmatpush1.bf16.xpose.msra.mxu0 0
        %970 = vmatprep.subr.bf16.mxu0 0
        %971 = vmatpush1.bf16.xpose.msra.mxu0 0
        %972 = vmatprep.subr.bf16.mxu0 0
        %973 = vmatpush1.bf16.xpose.msra.mxu0 0
        %974 = vmatprep.subr.bf16.mxu0 0
        %975 = vmatpush1.bf16.xpose.msra.mxu0 0
        %976 = vmatprep.subr.bf16.mxu0 0
        %977 = vmatpush1.bf16.xpose.msra.mxu0 0
        %978 = vmatprep.subr.bf16.mxu0 0
        %979 = vmatpush1.bf16.xpose.msra.mxu0 0
        %980 = vmatprep.subr.bf16.mxu0 0
        %981 = vmatpush1.bf16.xpose.msra.mxu0 0
        %982 = vmatprep.mubr.bf16.mxu0 0
        %983 = vmatmul.mubr.bf16.gmra.mrb[0].mxu0 %v945
        %v984 = vpop.f32.mrb[0].mxu0
        %v985 = vadd.f32 0.0, %v984
        %v986 = vpop.f32.mrb[0].mxu0
        %v987 = vpop.f32.mrb[0].mxu0
        %v988 = vpop.f32.mrb[0].mxu0
        %989 = vdwg.mxu0
        %v990 = vlaneseq
        %v991 = vshrl.u32 %v990, 7
        %v992 = vlaneseq
        %v993 = vand.u32 %v992, 127
        %vm994 = vcmp.le.s32.totalorder %v993, %v991
        %v995 = vsel %vm994, 1, 0
        %vm996 = vcmp.eq.s32.totalorder %v995, 1
        %v997 = vsel %vm996, %v847, -1e+30
        %v998 = vsel %vm996, %v893, -1e+30
        %v999 = vsel %vm996, %v939, -1e+30
        %v1000 = vsel %vm996, %v985, -1e+30
        %v1001 = vsel %vm805, %v997, -inf
        %1002 = vmax.xlane.f32.xlu0 %v1001
        %v1003 = vpop.xlane.xlu0 %1002
        %v1004 = vsel %vm805, %v998, -inf
        %1005 = vmax.xlane.f32.xlu0 %v1004
        %v1006 = vpop.xlane.xlu0 %1005
        %v1007 = vsel %vm805, %v999, -inf
        %1008 = vmax.xlane.f32.xlu0 %v1007
        %v1009 = vpop.xlane.xlu0 %1008
        %v1010 = vsel %vm805, %v1000, -inf
        %1011 = vmax.xlane.f32.xlu0 %v1010
        %v1012 = vpop.xlane.xlu0 %1011
        %v1013 = vsub.f32 %v997, %v1003
        %v1014 = vsub.f32 %v998, %v1006
        %v1015 = vsub.f32 %v999, %v1009
        %v1016 = vsub.f32 %v1000, %v1012
        %v1017 = vmul.f32 %v1013, 1.442695
        %v1018 = vpow.pop %v1017
        %v1019 = vmul.f32 %v1014, 1.442695
        %v1020 = vpow.pop %v1019
        %v1021 = vmul.f32 %v1015, 1.442695
        %v1022 = vpow.pop %v1021
        %v1023 = vmul.f32 %v1016, 1.442695
        %v1024 = vpow.pop %v1023
        %v1025 = vsel %vm805, %v1018, 0.0
        %1026 = vadd.xlane.f32.xlu0 %v1025
        %v1027 = vpop.xlane.xlu0 %1026
        %v1028 = vsel %vm805, %v1020, 0.0
        %1029 = vadd.xlane.f32.xlu0 %v1028
        %v1030 = vpop.xlane.xlu0 %1029
        %v1031 = vsel %vm805, %v1022, 0.0
        %1032 = vadd.xlane.f32.xlu0 %v1031
        %v1033 = vpop.xlane.xlu0 %1032
        %v1034 = vsel %vm805, %v1024, 0.0
        %1035 = vadd.xlane.f32.xlu0 %v1034
        %v1036 = vpop.xlane.xlu0 %1035
        %v1037 = vrcp.pop %v1027
        %v1038 = vrcp.pop %v1030
        %v1039 = vrcp.pop %v1033
        %v1040 = vrcp.pop %v1036
        %v1041 = vmul.f32 %v1018, %v1037
        %v1042 = vmul.f32 %v1020, %v1038
        %v1043 = vmul.f32 %v1022, %v1039
        %v1044 = vmul.f32 %v1024, %v1040
        %v1045 = vpack.c.bf16 %v1041, %v1041
        %v1046 = vpack.c.bf16 %v1042, %v1042
        %v1047 = vpack.c.bf16 %v1043, %v1043
        %v1048 = vpack.c.bf16 %v1044, %v1044
        %v1050 = vsel %vm805, %v1045, 0
        %vm1052 = vcmask 1043456
        %v1054 = vsel %vm1052, %v690, 0
        %1056 = vmatprep.subr.bf16.mxu0 0
        %1057 = vmatpush1.bf16.msra.mxu0 %v1054
        %1058 = vmatprep.subr.bf16.mxu0 0
        %1059 = vmatpush1.bf16.msra.mxu0 0
        %1060 = vmatprep.subr.bf16.mxu0 0
        %1061 = vmatpush1.bf16.msra.mxu0 0
        %1062 = vmatprep.subr.bf16.mxu0 0
        %1063 = vmatpush1.bf16.msra.mxu0 0
        %1064 = vmatprep.subr.bf16.mxu0 0
        %1065 = vmatpush1.bf16.msra.mxu0 0
        %1066 = vmatprep.subr.bf16.mxu0 0
        %1067 = vmatpush1.bf16.msra.mxu0 0
        %1068 = vmatprep.subr.bf16.mxu0 0
        %1069 = vmatpush1.bf16.msra.mxu0 0
        %1070 = vmatprep.subr.bf16.mxu0 0
        %1071 = vmatpush1.bf16.msra.mxu0 0
        %1072 = vmatprep.subr.bf16.mxu0 0
        %1073 = vmatpush1.bf16.msra.mxu0 0
        %1074 = vmatprep.subr.bf16.mxu0 0
        %1075 = vmatpush1.bf16.msra.mxu0 0
        %1076 = vmatprep.subr.bf16.mxu0 0
        %1077 = vmatpush1.bf16.msra.mxu0 0
        %1078 = vmatprep.subr.bf16.mxu0 0
        %1079 = vmatpush1.bf16.msra.mxu0 0
        %1080 = vmatprep.subr.bf16.mxu0 0
        %1081 = vmatpush1.bf16.msra.mxu0 0
        %1082 = vmatprep.subr.bf16.mxu0 0
        %1083 = vmatpush1.bf16.msra.mxu0 0
        %1084 = vmatprep.subr.bf16.mxu0 0
        %1085 = vmatpush1.bf16.msra.mxu0 0
        %1086 = vmatprep.subr.bf16.mxu0 0
        %1087 = vmatpush1.bf16.msra.mxu0 0
        %1088 = vmatprep.mubr.bf16.mxu0 0
        %1089 = vmatmul.mubr.bf16.gmra.mrb[0].mxu0 %v1050
        %v1090 = vpop.f32.mrb[0].mxu0
        %v1091 = vadd.f32 0.0, %v1090
        %v1092 = vpop.f32.mrb[0].mxu0
        %v1093 = vpop.f32.mrb[0].mxu0
        %v1094 = vpop.f32.mrb[0].mxu0
        %1095 = vdwg.mxu0
        %v1097 = vsel %vm805, %v1046, 0
        %v1100 = vsel %vm1052, %v691, 0
        %1102 = vmatprep.subr.bf16.mxu0 0
        %1103 = vmatpush1.bf16.msra.mxu0 %v1100
        %1104 = vmatprep.subr.bf16.mxu0 0
        %1105 = vmatpush1.bf16.msra.mxu0 0
        %1106 = vmatprep.subr.bf16.mxu0 0
        %1107 = vmatpush1.bf16.msra.mxu0 0
        %1108 = vmatprep.subr.bf16.mxu0 0
        %1109 = vmatpush1.bf16.msra.mxu0 0
        %1110 = vmatprep.subr.bf16.mxu0 0
        %1111 = vmatpush1.bf16.msra.mxu0 0
        %1112 = vmatprep.subr.bf16.mxu0 0
        %1113 = vmatpush1.bf16.msra.mxu0 0
        %1114 = vmatprep.subr.bf16.mxu0 0
        %1115 = vmatpush1.bf16.msra.mxu0 0
        %1116 = vmatprep.subr.bf16.mxu0 0
        %1117 = vmatpush1.bf16.msra.mxu0 0
        %1118 = vmatprep.subr.bf16.mxu0 0
        %1119 = vmatpush1.bf16.msra.mxu0 0
        %1120 = vmatprep.subr.bf16.mxu0 0
        %1121 = vmatpush1.bf16.msra.mxu0 0
        %1122 = vmatprep.subr.bf16.mxu0 0
        %1123 = vmatpush1.bf16.msra.mxu0 0
        %1124 = vmatprep.subr.bf16.mxu0 0
        %1125 = vmatpush1.bf16.msra.mxu0 0
        %1126 = vmatprep.subr.bf16.mxu0 0
        %1127 = vmatpush1.bf16.msra.mxu0 0
        %1128 = vmatprep.subr.bf16.mxu0 0
        %1129 = vmatpush1.bf16.msra.mxu0 0
        %1130 = vmatprep.subr.bf16.mxu0 0
        %1131 = vmatpush1.bf16.msra.mxu0 0
        %1132 = vmatprep.subr.bf16.mxu0 0
        %1133 = vmatpush1.bf16.msra.mxu0 0
        %1134 = vmatprep.mubr.bf16.mxu0 0
        %1135 = vmatmul.mubr.bf16.gmra.mrb[0].mxu0 %v1097
        %v1136 = vpop.f32.mrb[0].mxu0
        %v1137 = vadd.f32 0.0, %v1136
        %v1138 = vpop.f32.mrb[0].mxu0
        %v1139 = vpop.f32.mrb[0].mxu0
        %v1140 = vpop.f32.mrb[0].mxu0
        %1141 = vdwg.mxu0
        %v1143 = vsel %vm805, %v1047, 0
        %v1146 = vsel %vm1052, %v692, 0
        %1148 = vmatprep.subr.bf16.mxu0 0
        %1149 = vmatpush1.bf16.msra.mxu0 %v1146
        %1150 = vmatprep.subr.bf16.mxu0 0
        %1151 = vmatpush1.bf16.msra.mxu0 0
        %1152 = vmatprep.subr.bf16.mxu0 0
        %1153 = vmatpush1.bf16.msra.mxu0 0
        %1154 = vmatprep.subr.bf16.mxu0 0
        %1155 = vmatpush1.bf16.msra.mxu0 0
        %1156 = vmatprep.subr.bf16.mxu0 0
        %1157 = vmatpush1.bf16.msra.mxu0 0
        %1158 = vmatprep.subr.bf16.mxu0 0
        %1159 = vmatpush1.bf16.msra.mxu0 0
        %1160 = vmatprep.subr.bf16.mxu0 0
        %1161 = vmatpush1.bf16.msra.mxu0 0
        %1162 = vmatprep.subr.bf16.mxu0 0
        %1163 = vmatpush1.bf16.msra.mxu0 0
        %1164 = vmatprep.subr.bf16.mxu0 0
        %1165 = vmatpush1.bf16.msra.mxu0 0
        %1166 = vmatprep.subr.bf16.mxu0 0
        %1167 = vmatpush1.bf16.msra.mxu0 0
        %1168 = vmatprep.subr.bf16.mxu0 0
        %1169 = vmatpush1.bf16.msra.mxu0 0
        %1170 = vmatprep.subr.bf16.mxu0 0
        %1171 = vmatpush1.bf16.msra.mxu0 0
        %1172 = vmatprep.subr.bf16.mxu0 0
        %1173 = vmatpush1.bf16.msra.mxu0 0
        %1174 = vmatprep.subr.bf16.mxu0 0
        %1175 = vmatpush1.bf16.msra.mxu0 0
        %1176 = vmatprep.subr.bf16.mxu0 0
        %1177 = vmatpush1.bf16.msra.mxu0 0
        %1178 = vmatprep.subr.bf16.mxu0 0
        %1179 = vmatpush1.bf16.msra.mxu0 0
        %1180 = vmatprep.mubr.bf16.mxu0 0
        %1181 = vmatmul.mubr.bf16.gmra.mrb[0].mxu0 %v1143
        %v1182 = vpop.f32.mrb[0].mxu0
        %v1183 = vadd.f32 0.0, %v1182
        %v1184 = vpop.f32.mrb[0].mxu0
        %v1185 = vpop.f32.mrb[0].mxu0
        %v1186 = vpop.f32.mrb[0].mxu0
        %1187 = vdwg.mxu0
        %v1189 = vsel %vm805, %v1048, 0
        %v1192 = vsel %vm1052, %v693, 0
        %1194 = vmatprep.subr.bf16.mxu0 0
        %1195 = vmatpush1.bf16.msra.mxu0 %v1192
        %1196 = vmatprep.subr.bf16.mxu0 0
        %1197 = vmatpush1.bf16.msra.mxu0 0
        %1198 = vmatprep.subr.bf16.mxu0 0
        %1199 = vmatpush1.bf16.msra.mxu0 0
        %1200 = vmatprep.subr.bf16.mxu0 0
        %1201 = vmatpush1.bf16.msra.mxu0 0
        %1202 = vmatprep.subr.bf16.mxu0 0
        %1203 = vmatpush1.bf16.msra.mxu0 0
        %1204 = vmatprep.subr.bf16.mxu0 0
        %1205 = vmatpush1.bf16.msra.mxu0 0
        %1206 = vmatprep.subr.bf16.mxu0 0
        %1207 = vmatpush1.bf16.msra.mxu0 0
        %1208 = vmatprep.subr.bf16.mxu0 0
        %1209 = vmatpush1.bf16.msra.mxu0 0
        %1210 = vmatprep.subr.bf16.mxu0 0
        %1211 = vmatpush1.bf16.msra.mxu0 0
        %1212 = vmatprep.subr.bf16.mxu0 0
        %1213 = vmatpush1.bf16.msra.mxu0 0
        %1214 = vmatprep.subr.bf16.mxu0 0
        %1215 = vmatpush1.bf16.msra.mxu0 0
        %1216 = vmatprep.subr.bf16.mxu0 0
        %1217 = vmatpush1.bf16.msra.mxu0 0
        %1218 = vmatprep.subr.bf16.mxu0 0
        %1219 = vmatpush1.bf16.msra.mxu0 0
        %1220 = vmatprep.subr.bf16.mxu0 0
        %1221 = vmatpush1.bf16.msra.mxu0 0
        %1222 = vmatprep.subr.bf16.mxu0 0
        %1223 = vmatpush1.bf16.msra.mxu0 0
        %1224 = vmatprep.subr.bf16.mxu0 0
        %1225 = vmatpush1.bf16.msra.mxu0 0
        %1226 = vmatprep.mubr.bf16.mxu0 0
        %1227 = vmatmul.mubr.bf16.gmra.mrb[0].mxu0 %v1189
        %v1228 = vpop.f32.mrb[0].mxu0
        %v1229 = vadd.f32 0.0, %v1228
        %v1230 = vpop.f32.mrb[0].mxu0
        %v1231 = vpop.f32.mrb[0].mxu0
        %v1232 = vpop.f32.mrb[0].mxu0
        %1233 = vdwg.mxu0
        %v1234 = vpack.c.bf16 %v1091, %v1091
        %v1235 = vpack.c.bf16 %v1137, %v1137
        %v1236 = vpack.c.bf16 %v1183, %v1183
        %v1237 = vpack.c.bf16 %v1229, %v1229
        %v1238 = vld [vmem:[#allocation5] sm:$0xf]
        %v1239 = vld [vmem:[#allocation5 + $0x4] sm:$0xf]
        %v1240 = vld [vmem:[#allocation5 + $0x8] sm:$0xf]
        %v1241 = vld [vmem:[#allocation5 + $0xc] sm:$0xf]
        %v1243 = vsel %vm805, %v1234, 0
        %v1246 = vsel %vm1052, %v1238, 0
        %1248 = vmatprep.subr.bf16.mxu0 0
        %1249 = vmatpush1.bf16.msra.mxu0 %v1246
        %1250 = vmatprep.subr.bf16.mxu0 0
        %1251 = vmatpush1.bf16.msra.mxu0 0
        %1252 = vmatprep.subr.bf16.mxu0 0
        %1253 = vmatpush1.bf16.msra.mxu0 0
        %1254 = vmatprep.subr.bf16.mxu0 0
        %1255 = vmatpush1.bf16.msra.mxu0 0
        %1256 = vmatprep.subr.bf16.mxu0 0
        %1257 = vmatpush1.bf16.msra.mxu0 0
        %1258 = vmatprep.subr.bf16.mxu0 0
        %1259 = vmatpush1.bf16.msra.mxu0 0
        %1260 = vmatprep.subr.bf16.mxu0 0
        %1261 = vmatpush1.bf16.msra.mxu0 0
        %1262 = vmatprep.subr.bf16.mxu0 0
        %1263 = vmatpush1.bf16.msra.mxu0 0
        %1264 = vmatprep.subr.bf16.mxu0 0
        %1265 = vmatpush1.bf16.msra.mxu0 0
        %1266 = vmatprep.subr.bf16.mxu0 0
        %1267 = vmatpush1.bf16.msra.mxu0 0
        %1268 = vmatprep.subr.bf16.mxu0 0
        %1269 = vmatpush1.bf16.msra.mxu0 0
        %1270 = vmatprep.subr.bf16.mxu0 0
        %1271 = vmatpush1.bf16.msra.mxu0 0
        %1272 = vmatprep.subr.bf16.mxu0 0
        %1273 = vmatpush1.bf16.msra.mxu0 0
        %1274 = vmatprep.subr.bf16.mxu0 0
        %1275 = vmatpush1.bf16.msra.mxu0 0
        %1276 = vmatprep.subr.bf16.mxu0 0
        %1277 = vmatpush1.bf16.msra.mxu0 0
        %1278 = vmatprep.subr.bf16.mxu0 0
        %1279 = vmatpush1.bf16.msra.mxu0 0
        %1280 = vmatprep.mubr.bf16.mxu0 0
        %1281 = vmatmul.mubr.bf16.gmra.mrb[0].mxu0 %v1243
        %v1282 = vpop.f32.mrb[0].mxu0
        %v1283 = vadd.f32 0.0, %v1282
        %v1284 = vpop.f32.mrb[0].mxu0
        %v1285 = vpop.f32.mrb[0].mxu0
        %v1286 = vpop.f32.mrb[0].mxu0
        %1287 = vdwg.mxu0
        %v1289 = vsel %vm805, %v1235, 0
        %v1292 = vsel %vm1052, %v1239, 0
        %1294 = vmatprep.subr.bf16.mxu0 0
        %1295 = vmatpush1.bf16.msra.mxu0 %v1292
        %1296 = vmatprep.subr.bf16.mxu0 0
        %1297 = vmatpush1.bf16.msra.mxu0 0
        %1298 = vmatprep.subr.bf16.mxu0 0
        %1299 = vmatpush1.bf16.msra.mxu0 0
        %1300 = vmatprep.subr.bf16.mxu0 0
        %1301 = vmatpush1.bf16.msra.mxu0 0
        %1302 = vmatprep.subr.bf16.mxu0 0
        %1303 = vmatpush1.bf16.msra.mxu0 0
        %1304 = vmatprep.subr.bf16.mxu0 0
        %1305 = vmatpush1.bf16.msra.mxu0 0
        %1306 = vmatprep.subr.bf16.mxu0 0
        %1307 = vmatpush1.bf16.msra.mxu0 0
        %1308 = vmatprep.subr.bf16.mxu0 0
        %1309 = vmatpush1.bf16.msra.mxu0 0
        %1310 = vmatprep.subr.bf16.mxu0 0
        %1311 = vmatpush1.bf16.msra.mxu0 0
        %1312 = vmatprep.subr.bf16.mxu0 0
        %1313 = vmatpush1.bf16.msra.mxu0 0
        %1314 = vmatprep.subr.bf16.mxu0 0
        %1315 = vmatpush1.bf16.msra.mxu0 0
        %1316 = vmatprep.subr.bf16.mxu0 0
        %1317 = vmatpush1.bf16.msra.mxu0 0
        %1318 = vmatprep.subr.bf16.mxu0 0
        %1319 = vmatpush1.bf16.msra.mxu0 0
        %1320 = vmatprep.subr.bf16.mxu0 0
        %1321 = vmatpush1.bf16.msra.mxu0 0
        %1322 = vmatprep.subr.bf16.mxu0 0
        %1323 = vmatpush1.bf16.msra.mxu0 0
        %1324 = vmatprep.subr.bf16.mxu0 0
        %1325 = vmatpush1.bf16.msra.mxu0 0
        %1326 = vmatprep.mubr.bf16.mxu0 0
        %1327 = vmatmul.mubr.bf16.gmra.mrb[0].mxu0 %v1289
        %v1328 = vpop.f32.mrb[0].mxu0
        %v1329 = vadd.f32 0.0, %v1328
        %v1330 = vpop.f32.mrb[0].mxu0
        %v1331 = vpop.f32.mrb[0].mxu0
        %v1332 = vpop.f32.mrb[0].mxu0
        %1333 = vdwg.mxu0
        %v1335 = vsel %vm805, %v1236, 0
        %v1338 = vsel %vm1052, %v1240, 0
        %1340 = vmatprep.subr.bf16.mxu0 0
        %1341 = vmatpush1.bf16.msra.mxu0 %v1338
        %1342 = vmatprep.subr.bf16.mxu0 0
        %1343 = vmatpush1.bf16.msra.mxu0 0
        %1344 = vmatprep.subr.bf16.mxu0 0
        %1345 = vmatpush1.bf16.msra.mxu0 0
        %1346 = vmatprep.subr.bf16.mxu0 0
        %1347 = vmatpush1.bf16.msra.mxu0 0
        %1348 = vmatprep.subr.bf16.mxu0 0
        %1349 = vmatpush1.bf16.msra.mxu0 0
        %1350 = vmatprep.subr.bf16.mxu0 0
        %1351 = vmatpush1.bf16.msra.mxu0 0
        %1352 = vmatprep.subr.bf16.mxu0 0
        %1353 = vmatpush1.bf16.msra.mxu0 0
        %1354 = vmatprep.subr.bf16.mxu0 0
        %1355 = vmatpush1.bf16.msra.mxu0 0
        %1356 = vmatprep.subr.bf16.mxu0 0
        %1357 = vmatpush1.bf16.msra.mxu0 0
        %1358 = vmatprep.subr.bf16.mxu0 0
        %1359 = vmatpush1.bf16.msra.mxu0 0
        %1360 = vmatprep.subr.bf16.mxu0 0
        %1361 = vmatpush1.bf16.msra.mxu0 0
        %1362 = vmatprep.subr.bf16.mxu0 0
        %1363 = vmatpush1.bf16.msra.mxu0 0
        %1364 = vmatprep.subr.bf16.mxu0 0
        %1365 = vmatpush1.bf16.msra.mxu0 0
        %1366 = vmatprep.subr.bf16.mxu0 0
        %1367 = vmatpush1.bf16.msra.mxu0 0
        %1368 = vmatprep.subr.bf16.mxu0 0
        %1369 = vmatpush1.bf16.msra.mxu0 0
        %1370 = vmatprep.subr.bf16.mxu0 0
        %1371 = vmatpush1.bf16.msra.mxu0 0
        %1372 = vmatprep.mubr.bf16.mxu0 0
        %1373 = vmatmul.mubr.bf16.gmra.mrb[0].mxu0 %v1335
        %v1374 = vpop.f32.mrb[0].mxu0
        %v1375 = vadd.f32 0.0, %v1374
        %v1376 = vpop.f32.mrb[0].mxu0
        %v1377 = vpop.f32.mrb[0].mxu0
        %v1378 = vpop.f32.mrb[0].mxu0
        %1379 = vdwg.mxu0
        %v1381 = vsel %vm805, %v1237, 0
        %v1384 = vsel %vm1052, %v1241, 0
        %1386 = vmatprep.subr.bf16.mxu0 0
        %1387 = vmatpush1.bf16.msra.mxu0 %v1384
        %1388 = vmatprep.subr.bf16.mxu0 0
        %1389 = vmatpush1.bf16.msra.mxu0 0
        %1390 = vmatprep.subr.bf16.mxu0 0
        %1391 = vmatpush1.bf16.msra.mxu0 0
        %1392 = vmatprep.subr.bf16.mxu0 0
        %1393 = vmatpush1.bf16.msra.mxu0 0
        %1394 = vmatprep.subr.bf16.mxu0 0
        %1395 = vmatpush1.bf16.msra.mxu0 0
        %1396 = vmatprep.subr.bf16.mxu0 0
        %1397 = vmatpush1.bf16.msra.mxu0 0
        %1398 = vmatprep.subr.bf16.mxu0 0
        %1399 = vmatpush1.bf16.msra.mxu0 0
        %1400 = vmatprep.subr.bf16.mxu0 0
        %1401 = vmatpush1.bf16.msra.mxu0 0
        %1402 = vmatprep.subr.bf16.mxu0 0
        %1403 = vmatpush1.bf16.msra.mxu0 0
        %1404 = vmatprep.subr.bf16.mxu0 0
        %1405 = vmatpush1.bf16.msra.mxu0 0
        %1406 = vmatprep.subr.bf16.mxu0 0
        %1407 = vmatpush1.bf16.msra.mxu0 0
        %1408 = vmatprep.subr.bf16.mxu0 0
        %1409 = vmatpush1.bf16.msra.mxu0 0
        %1410 = vmatprep.subr.bf16.mxu0 0
        %1411 = vmatpush1.bf16.msra.mxu0 0
        %1412 = vmatprep.subr.bf16.mxu0 0
        %1413 = vmatpush1.bf16.msra.mxu0 0
        %1414 = vmatprep.subr.bf16.mxu0 0
        %1415 = vmatpush1.bf16.msra.mxu0 0
        %1416 = vmatprep.subr.bf16.mxu0 0
        %1417 = vmatpush1.bf16.msra.mxu0 0
        %1418 = vmatprep.mubr.bf16.mxu0 0
        %1419 = vmatmul.mubr.bf16.gmra.mrb[0].mxu0 %v1381
        %v1420 = vpop.f32.mrb[0].mxu0
        %v1421 = vadd.f32 0.0, %v1420
        %v1422 = vpop.f32.mrb[0].mxu0
        %v1423 = vpop.f32.mrb[0].mxu0
        %v1424 = vpop.f32.mrb[0].mxu0
        %1425 = vdwg.mxu0
        %v1426 = vsel %vm471, %v1283, 0.0
        %v1427 = vsel %vm471, %v1329, 0.0
        %v1428 = vadd.f32 %v1426, %v1427
        %v1429 = vsel %vm471, %v1375, 0.0
        %v1430 = vadd.f32 %v1428, %v1429
        %v1431 = vsel %vm471, %v1421, 0.0
        %v1432 = vadd.f32 %v1430, %v1431
        %v1433 = vadd.f32 %v469, %v1432
        %v1434 = vmul.f32 %v1433, %v1433
        %v1435 = vsel %vm471, %v1434, 0.0
        %1436 = vadd.xlane.f32.xlu0 %v1435
        %v1437 = vpop.xlane.xlu0 %1436
        %v1438 = vmul.f32 %v1437, %v475
        %v1439 = vadd.f32 %v1438, 1e-05
        %v1440 = vrsqrt.pop %v1439
        %v1441 = vmul.f32 %v1433, %v1440
        %v1442 = vld [vmem:[%s9] sm:$0x1]
        %v1444 = vlaneseq
        %v1445 = vshrl.u32 %v1444, 7
        %v1446 = vsub.s32 0, %v1445
        %v1447 = vrot.slane %v1442, %v1446
        %v1449 = vmul.f32 %v1441, %v1447
        %v1450 = vpack.c.bf16 %v1449, %v1449
        %v1451 = vld [vmem:[#allocation7] sm:$0xf]
        %v1452 = vld [vmem:[#allocation7 + $0x4] sm:$0xf]
        %v1453 = vld [vmem:[#allocation7 + $0x8] sm:$0xf]
        %v1454 = vld [vmem:[#allocation7 + $0xc] sm:$0xf]
        %v1459 = vunpack.c.l.b16 %v1451
        %v1460 = vunpack.c.l.b16 %v1452
        %v1461 = vunpack.c.l.b16 %v1453
        %v1462 = vunpack.c.l.b16 %v1454
        %v1463 = vpack.c.b16 %v1460, %v1459
        %v1464 = vpack.c.b16 %v1462, %v1461
        %v1468 = vsel %vm471, %v1450, 0
        %1470 = vmatprep.subr.bf16.mxu0 0
        %1471 = vmatpush1.bf16.msra.mxu0 %v1463
        %1472 = vmatprep.subr.bf16.mxu0 0
        %1473 = vmatpush1.bf16.msra.mxu0 %v1464
        %1474 = vmatprep.subr.bf16.mxu0 0
        %1475 = vmatpush1.bf16.msra.mxu0 0
        %1476 = vmatprep.subr.bf16.mxu0 0
        %1477 = vmatpush1.bf16.msra.mxu0 0
        %1478 = vmatprep.subr.bf16.mxu0 0
        %1479 = vmatpush1.bf16.msra.mxu0 0
        %1480 = vmatprep.subr.bf16.mxu0 0
        %1481 = vmatpush1.bf16.msra.mxu0 0
        %1482 = vmatprep.subr.bf16.mxu0 0
        %1483 = vmatpush1.bf16.msra.mxu0 0
        %1484 = vmatprep.subr.bf16.mxu0 0
        %1485 = vmatpush1.bf16.msra.mxu0 0
        %1486 = vmatprep.subr.bf16.mxu0 0
        %1487 = vmatpush1.bf16.msra.mxu0 0
        %1488 = vmatprep.subr.bf16.mxu0 0
        %1489 = vmatpush1.bf16.msra.mxu0 0
        %1490 = vmatprep.subr.bf16.mxu0 0
        %1491 = vmatpush1.bf16.msra.mxu0 0
        %1492 = vmatprep.subr.bf16.mxu0 0
        %1493 = vmatpush1.bf16.msra.mxu0 0
        %1494 = vmatprep.subr.bf16.mxu0 0
        %1495 = vmatpush1.bf16.msra.mxu0 0
        %1496 = vmatprep.subr.bf16.mxu0 0
        %1497 = vmatpush1.bf16.msra.mxu0 0
        %1498 = vmatprep.subr.bf16.mxu0 0
        %1499 = vmatpush1.bf16.msra.mxu0 0
        %1500 = vmatprep.subr.bf16.mxu0 0
        %1501 = vmatpush1.bf16.msra.mxu0 0
        %1502 = vmatprep.mubr.bf16.mxu0 0
        %1503 = vmatmul.mubr.bf16.gmra.mrb[0].mxu0 %v1468
        %v1504 = vpop.f32.mrb[0].mxu0
        %v1505 = vadd.f32 0.0, %v1504
        %v1506 = vpop.f32.mrb[0].mxu0
        %v1507 = vpop.f32.mrb[0].mxu0
        %v1508 = vpop.f32.mrb[0].mxu0
        %1509 = vdwg.mxu0
        %v1510 = vld [vmem:[#allocation8] sm:$0xf]
        %v1511 = vld [vmem:[#allocation8 + $0x4] sm:$0xf]
        %v1512 = vld [vmem:[#allocation8 + $0x8] sm:$0xf]
        %v1513 = vld [vmem:[#allocation8 + $0xc] sm:$0xf]
        %v1518 = vunpack.c.l.b16 %v1510
        %v1519 = vunpack.c.l.b16 %v1511
        %v1520 = vunpack.c.l.b16 %v1512
        %v1521 = vunpack.c.l.b16 %v1513
        %v1522 = vpack.c.b16 %v1519, %v1518
        %v1523 = vpack.c.b16 %v1521, %v1520
        %1526 = vmatprep.subr.bf16.mxu0 0
        %1527 = vmatpush1.bf16.msra.mxu0 %v1522
        %1528 = vmatprep.subr.bf16.mxu0 0
        %1529 = vmatpush1.bf16.msra.mxu0 %v1523
        %1530 = vmatprep.subr.bf16.mxu0 0
        %1531 = vmatpush1.bf16.msra.mxu0 0
        %1532 = vmatprep.subr.bf16.mxu0 0
        %1533 = vmatpush1.bf16.msra.mxu0 0
        %1534 = vmatprep.subr.bf16.mxu0 0
        %1535 = vmatpush1.bf16.msra.mxu0 0
        %1536 = vmatprep.subr.bf16.mxu0 0
        %1537 = vmatpush1.bf16.msra.mxu0 0
        %1538 = vmatprep.subr.bf16.mxu0 0
        %1539 = vmatpush1.bf16.msra.mxu0 0
        %1540 = vmatprep.subr.bf16.mxu0 0
        %1541 = vmatpush1.bf16.msra.mxu0 0
        %1542 = vmatprep.subr.bf16.mxu0 0
        %1543 = vmatpush1.bf16.msra.mxu0 0
        %1544 = vmatprep.subr.bf16.mxu0 0
        %1545 = vmatpush1.bf16.msra.mxu0 0
        %1546 = vmatprep.subr.bf16.mxu0 0
        %1547 = vmatpush1.bf16.msra.mxu0 0
        %1548 = vmatprep.subr.bf16.mxu0 0
        %1549 = vmatpush1.bf16.msra.mxu0 0
        %1550 = vmatprep.subr.bf16.mxu0 0
        %1551 = vmatpush1.bf16.msra.mxu0 0
        %1552 = vmatprep.subr.bf16.mxu0 0
        %1553 = vmatpush1.bf16.msra.mxu0 0
        %1554 = vmatprep.subr.bf16.mxu0 0
        %1555 = vmatpush1.bf16.msra.mxu0 0
        %1556 = vmatprep.subr.bf16.mxu0 0
        %1557 = vmatpush1.bf16.msra.mxu0 0
        %1558 = vmatprep.mubr.bf16.mxu0 0
        %1559 = vmatmul.mubr.bf16.gmra.mrb[0].mxu0 %v1468
        %v1560 = vpop.f32.mrb[0].mxu0
        %v1561 = vadd.f32 0.0, %v1560
        %v1562 = vpop.f32.mrb[0].mxu0
        %v1563 = vpop.f32.mrb[0].mxu0
        %v1564 = vpop.f32.mrb[0].mxu0
        %1565 = vdwg.mxu0
        %v1566 = vxor.u32 %v1505, 2147483648
        %v1567 = vmul.f32 %v1566, 1.442695
        %v1568 = vpow.pop %v1567
        %v1569 = vadd.f32 %v1568, 1.0
        %v1570 = vrcp.pop %v1569
        %v1571 = vmul.f32 1.0, %v1570
        %v1572 = vmul.f32 %v1505, %v1571
        %v1573 = vmul.f32 %v1572, %v1561
        %v1574 = vpack.c.bf16 %v1573, %v1573
        %v1575 = vld [vmem:[%s7] sm:$0xf]
        %v1576 = vld [vmem:[%s7 + $0x4] sm:$0xf]
        %v1577 = vld [vmem:[%s7 + $0x8] sm:$0xf]
        %v1578 = vld [vmem:[%s7 + $0xc] sm:$0xf]
        %v1579 = vld [vmem:[%s7 + $0x10] sm:$0xf]
        %v1580 = vld [vmem:[%s7 + $0x14] sm:$0xf]
        %v1581 = vld [vmem:[%s7 + $0x18] sm:$0xf]
        %v1582 = vld [vmem:[%s7 + $0x1c] sm:$0xf]
        %v1591 = vunpack.c.l.b16 %v1575
        %v1592 = vunpack.c.l.b16 %v1576
        %v1593 = vunpack.c.l.b16 %v1577
        %v1594 = vunpack.c.l.b16 %v1578
        %v1595 = vunpack.c.l.b16 %v1579
        %v1596 = vunpack.c.l.b16 %v1580
        %v1597 = vunpack.c.l.b16 %v1581
        %v1598 = vunpack.c.l.b16 %v1582
        %v1599 = vpack.c.b16 %v1592, %v1591
        %v1600 = vpack.c.b16 %v1594, %v1593
        %v1601 = vpack.c.b16 %v1596, %v1595
        %v1602 = vpack.c.b16 %v1598, %v1597
        %vm1607 = vcmask 523264
        %v1609 = vsel %vm1607, %v1574, 0
        %1611 = vmatprep.subr.bf16.mxu0 0
        %1612 = vmatpush1.bf16.msra.mxu0 %v1599
        %1613 = vmatprep.subr.bf16.mxu0 0
        %1614 = vmatpush1.bf16.msra.mxu0 %v1600
        %1615 = vmatprep.subr.bf16.mxu0 0
        %1616 = vmatpush1.bf16.msra.mxu0 %v1601
        %1617 = vmatprep.subr.bf16.mxu0 0
        %1618 = vmatpush1.bf16.msra.mxu0 %v1602
        %1619 = vmatprep.subr.bf16.mxu0 0
        %1620 = vmatpush1.bf16.msra.mxu0 0
        %1621 = vmatprep.subr.bf16.mxu0 0
        %1622 = vmatpush1.bf16.msra.mxu0 0
        %1623 = vmatprep.subr.bf16.mxu0 0
        %1624 = vmatpush1.bf16.msra.mxu0 0
        %1625 = vmatprep.subr.bf16.mxu0 0
        %1626 = vmatpush1.bf16.msra.mxu0 0
        %1627 = vmatprep.subr.bf16.mxu0 0
        %1628 = vmatpush1.bf16.msra.mxu0 0
        %1629 = vmatprep.subr.bf16.mxu0 0
        %1630 = vmatpush1.bf16.msra.mxu0 0
        %1631 = vmatprep.subr.bf16.mxu0 0
        %1632 = vmatpush1.bf16.msra.mxu0 0
        %1633 = vmatprep.subr.bf16.mxu0 0
        %1634 = vmatpush1.bf16.msra.mxu0 0
        %1635 = vmatprep.subr.bf16.mxu0 0
        %1636 = vmatpush1.bf16.msra.mxu0 0
        %1637 = vmatprep.subr.bf16.mxu0 0
        %1638 = vmatpush1.bf16.msra.mxu0 0
        %1639 = vmatprep.subr.bf16.mxu0 0
        %1640 = vmatpush1.bf16.msra.mxu0 0
        %1641 = vmatprep.subr.bf16.mxu0 0
        %1642 = vmatpush1.bf16.msra.mxu0 0
        %1643 = vmatprep.mubr.bf16.mxu0 0
        %1644 = vmatmul.mubr.bf16.gmra.mrb[0].mxu0 %v1609
        %v1645 = vpop.f32.mrb[0].mxu0
        %v1646 = vadd.f32 0.0, %v1645
        %v1647 = vpop.f32.mrb[0].mxu0
        %v1648 = vpop.f32.mrb[0].mxu0
        %v1649 = vpop.f32.mrb[0].mxu0
        %1650 = vdwg.mxu0
        %v1651 = vadd.f32 %v1433, %v1646
        %1652 = vst.msk [vmem:[%s463] sm:$0xff] %vm471, %v1651
        %s1653 = sand.u32 %s294, 1
        %s1654 = scalar_lea.sflag [#allocation4], %s1653
        %s1655 = sand.u32 %s294, 1
        %s1656 = smul.addr %s1655, 8
        %s1657 = scalar_lea.vmem [#allocation10], %s1656
        // Predicated region
        $region85: #{tpu_custom_call.1} parent=67 // pred_check
          %p1658 = pneg %p304
        $region86: #{tpu_custom_call.1} parent=67 // pred_check_branch
          %1660 = sbr.rel (%p1658) target = $region88
        $region87: #{tpu_custom_call.1} parent=67 // pred_region
          %s1662 = ssub.s32 128, 128
          %1663 = vsyncadd %s1654, %s1662
          %s1664 = smul.addr %s29, 128
          %s1665 = scalar_lea.hbm %s12, %s1664
          %s1667 = sshll.u32 %s1657, 4
          %s1668 = int_to_ptr.vmem [resolvable:$true] %s1667
          %1670 = dma.vmem_to_hbm [thread:$0]  %s1668, 128, %s1665, %s1654
        $region88: #{tpu_custom_call.1} parent=67 // pred_fallthru
          _
      $region68: #{tpu_custom_call.1} parent=5 // pred_fallthru
        _
      %p1671 = scmp.le.s32.totalorder 2, %s24
      // Predicated region
      $region89: #{tpu_custom_call.1} parent=5 // pred_check
        %p1672 = pneg %p1671
      $region90: #{tpu_custom_call.1} parent=5 // pred_check_branch
        %1674 = sbr.rel (%p1672) target = $region92
      $region91: #{tpu_custom_call.1} parent=5 // pred_region
        %s1675 = ssub.s32 %s24, 2
        // Predicated region
        $region93: #{tpu_custom_call.1} parent=91 // pred_check
          %p1676 = pneg %p310
        $region94: #{tpu_custom_call.1} parent=91 // pred_check_branch
          %1678 = sbr.rel (%p1676) target = $region96
        $region95: #{tpu_custom_call.1} parent=91 // pred_region
          %s1679 = sand.u32 %s295, 1
          %s1680 = scalar_lea.sflag [#allocation4], %s1679
          %s1681 = sand.u32 %s295, 1
          %s1682 = smul.addr %s1681, 8
          %s1683 = scalar_lea.vmem [#allocation10], %s1682
          %1684 = dma.done %s1680, 128
        $region96: #{tpu_custom_call.1} parent=91 // pred_fallthru
          _
      $region92: #{tpu_custom_call.1} parent=5 // pred_fallthru
        _
    $region6: #{tpu_custom_call.1} parent=1 // loop_footer
      %s28 = sadd.s32 1, %s24
    $region7: #{tpu_custom_call.1} parent=1 // loop_footer_branch
      %23 = sbr.rel target = $region3
    $region8: #{tpu_custom_call.1} parent=1 // loop_exit
      _
    %1685 = vsyncpa [#allocation3], 1
    %s1686 = scalar_lea.sflag [#allocation3], 1
    %1687 = vsyncpa %s1686, 1
    %1688 = vsyncpa [#allocation6], 1
    %1689 = vsyncpa [#allocation9], 1
    %1690 = vsyncpa [#allocation4], 1
    %s1691 = scalar_lea.sflag [#allocation4], 1
    %1692 = vsyncpa %s1691, 1

</llo_original>
